<compile_context>
chip_gen: v7x
topology: tpu7x:2x2x1
jax: 0.10.0
libtpu: 0.0.40
codegen_flags: <defaults>
</compile_context>

<pallas_src>
import functools

import jax
import jax.numpy as jnp
from jax import lax
from jax.experimental import pallas as pl
from jax.experimental.pallas import tpu as pltpu


def _round_up(x, m):
    return (x + m - 1) // m * m


def _fused_conv_kernel(x_ref, w_ref, b_ref, o_ref, *, tap_offsets, tm, wide):
    """Shift-and-accumulate conv.

    x_ref : (C_in, M_x)              bf16, whole (phase-decomposed) input, resident
    w_ref : (T, C_out_pad, C_in)     bf16, per-tap weight matrices, resident
    b_ref : (C_out_pad, 1)           f32 bias column, resident
    o_ref : (C_out_pad, tm)          f32 lane-dense output tile
    """
    m0 = pl.program_id(0) * tm
    acc = jnp.zeros(o_ref.shape, jnp.float32)
    for t, off in enumerate(tap_offsets):          # static unrolled tap loop
        abase = (off // 128) * 128                 # 128-aligned part of the shift
        coff = off - abase                         # residual lane offset (< 128)
        start = pl.multiple_of(m0 + abase, 128)    # aligned dynamic slice start
        x_wide = x_ref[:, pl.ds(start, wide)]      # (C_in, tm + 128) bf16
        x_tap = x_wide[:, coff:coff + tm]          # (C_in, tm)
        acc = acc + jnp.dot(w_ref[t], x_tap, preferred_element_type=jnp.float32)
    o_ref[...] = acc + b_ref[...]                  # bias added once, in the epilogue


@functools.partial(jax.jit,
                   static_argnames=("stride", "padding", "dilation", "compute_dtype"))
def conv2d_pallas(x, weight, bias, *, stride=(1, 1), padding=(0, 0),
                  dilation=(1, 1), compute_dtype=jnp.bfloat16):
    """x: (1, C_in, H, W) f32 NCHW; weight: (C_out, C_in, KH, KW); bias: (C_out,)."""
    _, c_in, h, w = x.shape
    c_out, _, kh, kw = weight.shape
    sh, sw = stride
    ph, pw = padding
    dh, dw = dilation

    h_pad, w_pad = h + 2 * ph, w + 2 * pw
    h_out = (h_pad - dh * (kh - 1) - 1) // sh + 1
    w_out = (w_pad - dw * (kw - 1) - 1) // sw + 1

    # --- glue: one ~1x pass over the input (no KH*KW im2col amplification) ---
    # Zero-pad spatially, then decompose into stride phases so that every
    # kernel tap becomes a *uniform* static shift in a flattened (C_in, M)
    # layout with lane pitch `wp` (a multiple of 128).
    hs = -(-h_pad // sh)                 # rows per stride phase
    ws = -(-w_pad // sw)                 # cols per stride phase
    wp = _round_up(ws, 128)              # lane pitch

    xp = jnp.pad(x[0], ((0, 0), (ph, ph), (pw, pw)))       # (C_in, H_pad, W_pad)
    planes = []
    for a in range(sh):
        for b in range(sw):
            pab = xp[:, a::sh, b::sw]
            planes.append(jnp.pad(
                pab, ((0, 0), (0, hs - pab.shape[1]), (0, wp - pab.shape[2]))))
    stacked = planes[0] if len(planes) == 1 else jnp.stack(planes, axis=1)
    x_flat = stacked.reshape(c_in, sh * sw * hs * wp)

    # Static per-tap shifts in the flattened layout.
    tap_offsets = []
    for ki in range(kh):
        for kj in range(kw):
            r, a = divmod(ki * dh, sh)
            c, b = divmod(kj * dw, sw)
            tap_offsets.append((a * sw + b) * hs * wp + r * wp + c)
    tap_offsets = tuple(tap_offsets)

    # Output tiling: lane-dense flattened M = H_out * wp, tiled tm-wide.
    m_out = h_out * wp
    tm = min(512, m_out)
    m_out_pad = _round_up(m_out, tm)
    num_m = m_out_pad // tm
    wide = tm + 128

    # Pad the flattened input so every (aligned start, wide) slice is in bounds.
    max_abase = max((off // 128) * 128 for off in tap_offsets)
    m_x = _round_up(max(x_flat.shape[1], (num_m - 1) * tm + max_abase + wide), 128)
    x_flat = jnp.pad(x_flat, ((0, 0), (0, m_x - x_flat.shape[1]))).astype(compute_dtype)

    # Per-tap (C_out, C_in) weight matrices (bf16) and an f32 bias column.
    c_out_pad = _round_up(c_out, 16)
    w_taps = jnp.transpose(weight, (2, 3, 0, 1)).reshape(kh * kw, c_out, c_in)
    w_taps = jnp.pad(w_taps, ((0, 0), (0, c_out_pad - c_out), (0, 0))).astype(compute_dtype)
    b_col = jnp.pad(bias.astype(jnp.float32).reshape(c_out, 1),
                    ((0, c_out_pad - c_out), (0, 0)))

    kernel = functools.partial(_fused_conv_kernel,
                               tap_offsets=tap_offsets, tm=tm, wide=wide)
    out_flat = pl.pallas_call(
        kernel,
        out_shape=jax.ShapeDtypeStruct((c_out_pad, m_out_pad), jnp.float32),
        grid_spec=pltpu.PrefetchScalarGridSpec(
            num_scalar_prefetch=0,
            grid=(num_m,),
            in_specs=[
                # Whole (phase-decomposed) input resident in VMEM; constant block
                # index -> DMA'd once for the whole grid.
                # TODO(synk): halo-tiled manual DMA for inputs too large for VMEM.
                pl.BlockSpec((c_in, m_x), lambda i: (0, 0)),
                pl.BlockSpec((kh * kw, c_out_pad, c_in), lambda i: (0, 0, 0)),
                pl.BlockSpec((c_out_pad, 1), lambda i: (0, 0)),
            ],
            out_specs=pl.BlockSpec((c_out_pad, tm), lambda i: (0, i)),
        ),
        compiler_params=pltpu.CompilerParams(
            dimension_semantics=("parallel",),     # M tiles shardable across TCs
            vmem_limit_bytes=48 * 1024 * 1024,     # stays within v7x's 64 MiB
        ),
    )(x_flat, w_taps, b_col)

    out = out_flat[:c_out, :m_out].reshape(c_out, h_out, wp)[:, :, :w_out]
    return out[None]                               # (1, C_out, H_out, W_out)


def _pair(v):
    return (v, v) if isinstance(v, int) else tuple(v)


class PallasDecoderConv2D:
    """JAX/Pallas equivalent of PyTorchDecoderConv2D (groups=1, padding_mode='zeros')."""

    def __init__(self, in_channels, out_channels, kernel_size, stride=1,
                 padding=0, dilation=1, groups=1, bias=True, padding_mode="zeros",
                 key=None):
        assert groups == 1, "groups != 1 not implemented"   # TODO(synk): grouped conv
        assert padding_mode == "zeros"                       # TODO(synk): only zero padding
        if key is None:
            key = jax.random.PRNGKey(0)
        self.in_channels = in_channels
        self.out_channels = out_channels
        self.kernel_size = _pair(kernel_size)
        self.stride = _pair(stride)
        self.padding = _pair(padding)
        self.dilation = _pair(dilation)

        kh, kw = self.kernel_size
        fan_in = in_channels * kh * kw
        bound = 1.0 / (fan_in ** 0.5)
        k_w, k_b = jax.random.split(key)
        # Deterministic init mimicking torch.nn.Conv2d's uniform(-1/sqrt(fan_in), ...)
        self.weight = jax.random.uniform(
            k_w, (out_channels, in_channels, kh, kw), jnp.float32, -bound, bound)
        if bias:
            self.bias = jax.random.uniform(
                k_b, (out_channels,), jnp.float32, -bound, bound)
        else:
            self.bias = jnp.zeros((out_channels,), jnp.float32)

    def forward(self, inputs):
        # PyTorchListStore semantics: concat stored tensors on dim 0, reshape to
        # (1, C_in, N_total, -1) NCHW, run the conv.
        x = jnp.concatenate([jnp.asarray(t, jnp.float32) for t in inputs], axis=0)
        n_total = x.shape[0]
        x = jnp.reshape(x, (1, self.in_channels, n_total, -1))
        out = conv2d_pallas(
            x, self.weight, self.bias,
            stride=self.stride, padding=self.padding, dilation=self.dilation)
        return {"content": out}


if __name__ == "__main__":
    key = jax.random.PRNGKey(0)
    k_mod, k_mod2, k_x1, k_x2 = jax.random.split(key, 4)

    in_channels, out_channels = 4, 8
    # Two "store" entries; concat -> (16, 64); reshape -> (1, 4, 16, 16) NCHW.
    x1 = jax.random.normal(k_x1, (8, 64), jnp.float32)
    x2 = jax.random.normal(k_x2, (8, 64), jnp.float32)
    x_nchw = jnp.concatenate([x1, x2], axis=0).reshape(1, in_channels, 16, -1)

    # Reference uses bf16-rounded operands (kernel computes bf16 x bf16 -> f32).
    xq = x_nchw.astype(jnp.bfloat16).astype(jnp.float32)

    def ref_conv(module, strides):
        wq = module.weight.astype(jnp.bfloat16).astype(jnp.float32)
        pads = tuple((p, p) for p in module.padding)
        r = lax.conv_general_dilated(
            xq, wq, window_strides=strides, padding=pads,
            rhs_dilation=module.dilation,
            dimension_numbers=("NCHW", "OIHW", "NCHW"))
        return r + module.bias.reshape(1, -1, 1, 1)

    # Case 1: stride 1, padding 1.
    module = PallasDecoderConv2D(in_channels, out_channels, kernel_size=3,
                                 stride=1, padding=1, dilation=1, bias=True, key=k_mod)
    out = jax.block_until_ready(module.forward([x1, x2])["content"])
    ref = jax.block_until_ready(ref_conv(module, (1, 1)))
    assert out.shape == (1, out_channels, 16, 16), out.shape
    assert jnp.allclose(out, ref, atol=1e-3, rtol=1e-3), \
        float(jnp.max(jnp.abs(out - ref)))

    # Case 2: strided conv exercises the stride-phase path of the same kernel.
    module2 = PallasDecoderConv2D(in_channels, out_channels, kernel_size=3,
                                  stride=2, padding=1, dilation=1, bias=True, key=k_mod2)
    out2 = jax.block_until_ready(module2.forward([x1, x2])["content"])
    ref2 = jax.block_until_ready(ref_conv(module2, (2, 2)))
    assert out2.shape == (1, out_channels, 8, 8), out2.shape
    assert jnp.allclose(out2, ref2, atol=1e-3, rtol=1e-3), \
        float(jnp.max(jnp.abs(out2 - ref2)))

    print("KERNEL_OK")
</pallas_src>

<mosaic_0001>
module attributes {stable_mosaic.version = 11 : i64} {
  func.func @_fused_conv_kernel(%arg0: i32, %arg1: memref<4x2432xbf16, #tpu.memory_space<vmem>>, %arg2: memref<9x16x4xbf16, #tpu.memory_space<vmem>>, %arg3: memref<16x1xf32, #tpu.memory_space<vmem>>, %arg4: memref<16x512xf32, #tpu.memory_space<vmem>>) attributes {dimension_semantics = [#tpu.dimension_semantics<parallel>], iteration_bounds = array<i64: 4>, scalar_prefetch = 0 : i64, scratch_operands = 0 : i64, tpu.core_type = #tpu.core_type<tc>, window_params = [{pipeline_mode = #tpu.pipeline_mode<synchronous>, transform_indices = @transform_0, window_bounds = array<i64: 4, 2432>}, {pipeline_mode = #tpu.pipeline_mode<synchronous>, transform_indices = @transform_1, window_bounds = array<i64: 9, 16, 4>}, {pipeline_mode = #tpu.pipeline_mode<synchronous>, transform_indices = @transform_2, window_bounds = array<i64: 16, 1>}, {transform_indices = @transform_3, window_bounds = array<i64: 16, 512>}]} {
    %c512_i32 = arith.constant 512 : i32
    %0 = arith.muli %arg0, %c512_i32 : i32
    %cst = arith.constant 0.000000e+00 : f32
    %1 = vector.broadcast %cst : f32 to vector<16x512xf32>
    %c0_i32 = arith.constant 0 : i32
    %2 = arith.addi %0, %c0_i32 : i32
    %3 = tpu.assume_multiple %2, 128 : i32
    %c0 = arith.constant 0 : index
    %4 = arith.index_cast %3 : i32 to index
    %5 = vector.load %arg1[%c0, %4] : memref<4x2432xbf16, #tpu.memory_space<vmem>>, vector<4x640xbf16>
    %6 = vector.extract_strided_slice %5 {offsets = [0, 0], sizes = [4, 512], strides = [1, 1]} : vector<4x640xbf16> to vector<4x512xbf16>
    %c0_0 = arith.constant 0 : index
    %c0_1 = arith.constant 0 : index
    %c0_2 = arith.constant 0 : index
    %7 = vector.load %arg2[%c0_0, %c0_1, %c0_2] : memref<9x16x4xbf16, #tpu.memory_space<vmem>>, vector<1x16x4xbf16>
    %8 = vector.shape_cast %7 : vector<1x16x4xbf16> to vector<16x4xbf16>
    %cst_3 = arith.constant dense<0.000000e+00> : vector<16x512xf32>
    %9 = tpu.matmul %8, %6, %cst_3 {dimension_numbers = #tpu.dot_dimension_numbers<[1], [0], [0], [1], [0, 0, 1, 1], [], []>} : vector<16x4xbf16>, vector<4x512xbf16>, vector<16x512xf32> -> vector<16x512xf32>
    %10 = arith.addf %1, %9 : vector<16x512xf32>
    %c0_i32_4 = arith.constant 0 : i32
    %11 = arith.addi %0, %c0_i32_4 : i32
    %12 = tpu.assume_multiple %11, 128 : i32
    %c0_5 = arith.constant 0 : index
    %13 = arith.index_cast %12 : i32 to index
    %14 = vector.load %arg1[%c0_5, %13] : memref<4x2432xbf16, #tpu.memory_space<vmem>>, vector<4x640xbf16>
    %15 = vector.extract_strided_slice %14 {offsets = [0, 1], sizes = [4, 512], strides = [1, 1]} : vector<4x640xbf16> to vector<4x512xbf16>
    %c1 = arith.constant 1 : index
    %c0_6 = arith.constant 0 : index
    %c0_7 = arith.constant 0 : index
    %16 = vector.load %arg2[%c1, %c0_6, %c0_7] : memref<9x16x4xbf16, #tpu.memory_space<vmem>>, vector<1x16x4xbf16>
    %17 = vector.shape_cast %16 : vector<1x16x4xbf16> to vector<16x4xbf16>
    %cst_8 = arith.constant dense<0.000000e+00> : vector<16x512xf32>
    %18 = tpu.matmul %17, %15, %cst_8 {dimension_numbers = #tpu.dot_dimension_numbers<[1], [0], [0], [1], [0, 0, 1, 1], [], []>} : vector<16x4xbf16>, vector<4x512xbf16>, vector<16x512xf32> -> vector<16x512xf32>
    %19 = arith.addf %10, %18 : vector<16x512xf32>
    %c0_i32_9 = arith.constant 0 : i32
    %20 = arith.addi %0, %c0_i32_9 : i32
    %21 = tpu.assume_multiple %20, 128 : i32
    %c0_10 = arith.constant 0 : index
    %22 = arith.index_cast %21 : i32 to index
    %23 = vector.load %arg1[%c0_10, %22] : memref<4x2432xbf16, #tpu.memory_space<vmem>>, vector<4x640xbf16>
    %24 = vector.extract_strided_slice %23 {offsets = [0, 2], sizes = [4, 512], strides = [1, 1]} : vector<4x640xbf16> to vector<4x512xbf16>
    %c2 = arith.constant 2 : index
    %c0_11 = arith.constant 0 : index
    %c0_12 = arith.constant 0 : index
    %25 = vector.load %arg2[%c2, %c0_11, %c0_12] : memref<9x16x4xbf16, #tpu.memory_space<vmem>>, vector<1x16x4xbf16>
    %26 = vector.shape_cast %25 : vector<1x16x4xbf16> to vector<16x4xbf16>
    %cst_13 = arith.constant dense<0.000000e+00> : vector<16x512xf32>
    %27 = tpu.matmul %26, %24, %cst_13 {dimension_numbers = #tpu.dot_dimension_numbers<[1], [0], [0], [1], [0, 0, 1, 1], [], []>} : vector<16x4xbf16>, vector<4x512xbf16>, vector<16x512xf32> -> vector<16x512xf32>
    %28 = arith.addf %19, %27 : vector<16x512xf32>
    %c128_i32 = arith.constant 128 : i32
    %29 = arith.addi %0, %c128_i32 : i32
    %30 = tpu.assume_multiple %29, 128 : i32
    %c0_14 = arith.constant 0 : index
    %31 = arith.index_cast %30 : i32 to index
    %32 = vector.load %arg1[%c0_14, %31] : memref<4x2432xbf16, #tpu.memory_space<vmem>>, vector<4x640xbf16>
    %33 = vector.extract_strided_slice %32 {offsets = [0, 0], sizes = [4, 512], strides = [1, 1]} : vector<4x640xbf16> to vector<4x512xbf16>
    %c3 = arith.constant 3 : index
    %c0_15 = arith.constant 0 : index
    %c0_16 = arith.constant 0 : index
    %34 = vector.load %arg2[%c3, %c0_15, %c0_16] : memref<9x16x4xbf16, #tpu.memory_space<vmem>>, vector<1x16x4xbf16>
    %35 = vector.shape_cast %34 : vector<1x16x4xbf16> to vector<16x4xbf16>
    %cst_17 = arith.constant dense<0.000000e+00> : vector<16x512xf32>
    %36 = tpu.matmul %35, %33, %cst_17 {dimension_numbers = #tpu.dot_dimension_numbers<[1], [0], [0], [1], [0, 0, 1, 1], [], []>} : vector<16x4xbf16>, vector<4x512xbf16>, vector<16x512xf32> -> vector<16x512xf32>
    %37 = arith.addf %28, %36 : vector<16x512xf32>
    %c128_i32_18 = arith.constant 128 : i32
    %38 = arith.addi %0, %c128_i32_18 : i32
    %39 = tpu.assume_multiple %38, 128 : i32
    %c0_19 = arith.constant 0 : index
    %40 = arith.index_cast %39 : i32 to index
    %41 = vector.load %arg1[%c0_19, %40] : memref<4x2432xbf16, #tpu.memory_space<vmem>>, vector<4x640xbf16>
    %42 = vector.extract_strided_slice %41 {offsets = [0, 1], sizes = [4, 512], strides = [1, 1]} : vector<4x640xbf16> to vector<4x512xbf16>
    %c4 = arith.constant 4 : index
    %c0_20 = arith.constant 0 : index
    %c0_21 = arith.constant 0 : index
    %43 = vector.load %arg2[%c4, %c0_20, %c0_21] : memref<9x16x4xbf16, #tpu.memory_space<vmem>>, vector<1x16x4xbf16>
    %44 = vector.shape_cast %43 : vector<1x16x4xbf16> to vector<16x4xbf16>
    %cst_22 = arith.constant dense<0.000000e+00> : vector<16x512xf32>
    %45 = tpu.matmul %44, %42, %cst_22 {dimension_numbers = #tpu.dot_dimension_numbers<[1], [0], [0], [1], [0, 0, 1, 1], [], []>} : vector<16x4xbf16>, vector<4x512xbf16>, vector<16x512xf32> -> vector<16x512xf32>
    %46 = arith.addf %37, %45 : vector<16x512xf32>
    %c128_i32_23 = arith.constant 128 : i32
    %47 = arith.addi %0, %c128_i32_23 : i32
    %48 = tpu.assume_multiple %47, 128 : i32
    %c0_24 = arith.constant 0 : index
    %49 = arith.index_cast %48 : i32 to index
    %50 = vector.load %arg1[%c0_24, %49] : memref<4x2432xbf16, #tpu.memory_space<vmem>>, vector<4x640xbf16>
    %51 = vector.extract_strided_slice %50 {offsets = [0, 2], sizes = [4, 512], strides = [1, 1]} : vector<4x640xbf16> to vector<4x512xbf16>
    %c5 = arith.constant 5 : index
    %c0_25 = arith.constant 0 : index
    %c0_26 = arith.constant 0 : index
    %52 = vector.load %arg2[%c5, %c0_25, %c0_26] : memref<9x16x4xbf16, #tpu.memory_space<vmem>>, vector<1x16x4xbf16>
    %53 = vector.shape_cast %52 : vector<1x16x4xbf16> to vector<16x4xbf16>
    %cst_27 = arith.constant dense<0.000000e+00> : vector<16x512xf32>
    %54 = tpu.matmul %53, %51, %cst_27 {dimension_numbers = #tpu.dot_dimension_numbers<[1], [0], [0], [1], [0, 0, 1, 1], [], []>} : vector<16x4xbf16>, vector<4x512xbf16>, vector<16x512xf32> -> vector<16x512xf32>
    %55 = arith.addf %46, %54 : vector<16x512xf32>
    %c256_i32 = arith.constant 256 : i32
    %56 = arith.addi %0, %c256_i32 : i32
    %57 = tpu.assume_multiple %56, 128 : i32
    %c0_28 = arith.constant 0 : index
    %58 = arith.index_cast %57 : i32 to index
    %59 = vector.load %arg1[%c0_28, %58] : memref<4x2432xbf16, #tpu.memory_space<vmem>>, vector<4x640xbf16>
    %60 = vector.extract_strided_slice %59 {offsets = [0, 0], sizes = [4, 512], strides = [1, 1]} : vector<4x640xbf16> to vector<4x512xbf16>
    %c6 = arith.constant 6 : index
    %c0_29 = arith.constant 0 : index
    %c0_30 = arith.constant 0 : index
    %61 = vector.load %arg2[%c6, %c0_29, %c0_30] : memref<9x16x4xbf16, #tpu.memory_space<vmem>>, vector<1x16x4xbf16>
    %62 = vector.shape_cast %61 : vector<1x16x4xbf16> to vector<16x4xbf16>
    %cst_31 = arith.constant dense<0.000000e+00> : vector<16x512xf32>
    %63 = tpu.matmul %62, %60, %cst_31 {dimension_numbers = #tpu.dot_dimension_numbers<[1], [0], [0], [1], [0, 0, 1, 1], [], []>} : vector<16x4xbf16>, vector<4x512xbf16>, vector<16x512xf32> -> vector<16x512xf32>
    %64 = arith.addf %55, %63 : vector<16x512xf32>
    %c256_i32_32 = arith.constant 256 : i32
    %65 = arith.addi %0, %c256_i32_32 : i32
    %66 = tpu.assume_multiple %65, 128 : i32
    %c0_33 = arith.constant 0 : index
    %67 = arith.index_cast %66 : i32 to index
    %68 = vector.load %arg1[%c0_33, %67] : memref<4x2432xbf16, #tpu.memory_space<vmem>>, vector<4x640xbf16>
    %69 = vector.extract_strided_slice %68 {offsets = [0, 1], sizes = [4, 512], strides = [1, 1]} : vector<4x640xbf16> to vector<4x512xbf16>
    %c7 = arith.constant 7 : index
    %c0_34 = arith.constant 0 : index
    %c0_35 = arith.constant 0 : index
    %70 = vector.load %arg2[%c7, %c0_34, %c0_35] : memref<9x16x4xbf16, #tpu.memory_space<vmem>>, vector<1x16x4xbf16>
    %71 = vector.shape_cast %70 : vector<1x16x4xbf16> to vector<16x4xbf16>
    %cst_36 = arith.constant dense<0.000000e+00> : vector<16x512xf32>
    %72 = tpu.matmul %71, %69, %cst_36 {dimension_numbers = #tpu.dot_dimension_numbers<[1], [0], [0], [1], [0, 0, 1, 1], [], []>} : vector<16x4xbf16>, vector<4x512xbf16>, vector<16x512xf32> -> vector<16x512xf32>
    %73 = arith.addf %64, %72 : vector<16x512xf32>
    %c256_i32_37 = arith.constant 256 : i32
    %74 = arith.addi %0, %c256_i32_37 : i32
    %75 = tpu.assume_multiple %74, 128 : i32
    %c0_38 = arith.constant 0 : index
    %76 = arith.index_cast %75 : i32 to index
    %77 = vector.load %arg1[%c0_38, %76] : memref<4x2432xbf16, #tpu.memory_space<vmem>>, vector<4x640xbf16>
    %78 = vector.extract_strided_slice %77 {offsets = [0, 2], sizes = [4, 512], strides = [1, 1]} : vector<4x640xbf16> to vector<4x512xbf16>
    %c8 = arith.constant 8 : index
    %c0_39 = arith.constant 0 : index
    %c0_40 = arith.constant 0 : index
    %79 = vector.load %arg2[%c8, %c0_39, %c0_40] : memref<9x16x4xbf16, #tpu.memory_space<vmem>>, vector<1x16x4xbf16>
    %80 = vector.shape_cast %79 : vector<1x16x4xbf16> to vector<16x4xbf16>
    %cst_41 = arith.constant dense<0.000000e+00> : vector<16x512xf32>
    %81 = tpu.matmul %80, %78, %cst_41 {dimension_numbers = #tpu.dot_dimension_numbers<[1], [0], [0], [1], [0, 0, 1, 1], [], []>} : vector<16x4xbf16>, vector<4x512xbf16>, vector<16x512xf32> -> vector<16x512xf32>
    %82 = arith.addf %73, %81 : vector<16x512xf32>
    %c0_42 = arith.constant 0 : index
    %c0_43 = arith.constant 0 : index
    %83 = vector.load %arg3[%c0_42, %c0_43] : memref<16x1xf32, #tpu.memory_space<vmem>>, vector<16x1xf32>
    %84 = vector.broadcast %83 : vector<16x1xf32> to vector<16x512xf32>
    %85 = arith.addf %82, %84 : vector<16x512xf32>
    %c0_44 = arith.constant 0 : index
    %c0_45 = arith.constant 0 : index
    %86 = vector.load %arg4[%c0_44, %c0_45] : memref<16x512xf32, #tpu.memory_space<vmem>>, vector<16x512xf32>
    tpu.vector_store %arg4[%c0_44, %c0_45], %85 {strides = array<i32>} : memref<16x512xf32, #tpu.memory_space<vmem>>, vector<16x512xf32>,
    return
  }
  func.func @transform_0(%arg0: i32) -> (i32, i32) {
    %c0_i32 = arith.constant 0 : i32
    %c0_i32_0 = arith.constant 0 : i32
    %c0_i32_1 = arith.constant 0 : i32
    return %c0_i32, %c0_i32_0 : i32, i32
  }
  func.func @transform_1(%arg0: i32) -> (i32, i32, i32) {
    %c0_i32 = arith.constant 0 : i32
    %c0_i32_0 = arith.constant 0 : i32
    %c0_i32_1 = arith.constant 0 : i32
    %c0_i32_2 = arith.constant 0 : i32
    return %c0_i32, %c0_i32_0, %c0_i32_1 : i32, i32, i32
  }
  func.func @transform_2(%arg0: i32) -> (i32, i32) {
    %c0_i32 = arith.constant 0 : i32
    %c0_i32_0 = arith.constant 0 : i32
    %c0_i32_1 = arith.constant 0 : i32
    return %c0_i32, %c0_i32_0 : i32, i32
  }
  func.func @transform_3(%arg0: i32) -> (i32, i32) {
    %c0_i32 = arith.constant 0 : i32
    %c0_i32_0 = arith.constant 0 : i32
    return %c0_i32, %arg0 : i32, i32
  }
}

</mosaic_0001>

<llo_original>
// kernel: conv2d_pallas.1
$region0: #{conv2d_pallas.1}
  #allocation0 [shape = 'u32[]', space=smem, size = 0x4, offset = 0x4, fixed_abs, tag = 'smem constant byte address 0x4 - core index']
  #allocation1 [shape = 'u32[144,128]{1,0:T(1,128)}', space=vmem, size = 0x12000, scoped, tag = 'internal scratch']
  %s0 = inlined_call_operand.vmem [shape: bf16[4,2432], index: 0, kind: input, shape index: {}]
  %s1 = inlined_call_operand.vmem [shape: bf16[9,16,4], index: 1, kind: input, shape index: {}]
  %s2 = inlined_call_operand.vmem [shape: f32[16,1], index: 2, kind: input, shape index: {}]
  %s3 = inlined_call_operand.vmem [shape: f32[16,2048], index: 3, kind: output, shape index: {}]
  %s4 = sld [smem:[#allocation0]]
  $region64: #{conv2d_pallas.1} parent=0
    _
  %s6 = ssub.s32 1, %s4
  %s7 = scalar_select 0, %s6, %s4
  $region1: #{conv2d_pallas.1} parent=0
    #allocation2 [shape = 'u8[65536]{0}', space=vmem, size = 0x10000, scoped, tag = 'output window, operand 0']
    loop: start=0, step=1, limit=6
    $region2: #{conv2d_pallas.1} parent=1 // loop_pre_header
      _
    $region3: #{conv2d_pallas.1} parent=1 // loop_header
      %s9 = sphi 0, %s13
      %p10 = scmp.ge.s32.totalorder %s9, 6
      %s17 = sphi 0, %s17
      %s19 = sphi 0, %s17
      %s20 = sphi 0, %s19
      %s34 = sphi 0, %s20
      %s38 = sphi 0, %s38
      %s40 = sphi 0, %s38
      %s41 = sphi 0, %s40
      %s55 = sphi 0, %s41
      %s59 = sphi 0, %s59
      %s61 = sphi 0, %s59
      %s62 = sphi 0, %s61
      %s76 = sphi 0, %s62
      %s82 = sphi 0, %s84
      %s85 = sphi 0, %s82
      %s86 = sphi 0, %s85
      %s102 = sphi 0, %s86
    $region4: #{conv2d_pallas.1} parent=1 // loop_header_branch
      %12 = sbr.rel (%p10) target = $region8
    $region5: #{conv2d_pallas.1} parent=1 // loop_body
      %s14 = ssub.s32 %s9, 1
      %s15 = ssub.s32 %s9, 2
      %s16 = sadd.s32 %s9, 1
      %s18 = sadd.s32 %s17, 1
      %p21 = scmp.eq.s32.totalorder %s9, 3
      %p22 = scmp.ne.s32.totalorder %s17, %s19
      %p23 = scmp.eq.s32.totalorder %s9, 0
      %p24 = por %p22, %p23
      %p25 = scmp.ne.s32.totalorder %s17, %s19
      %p26 = scmp.eq.s32.totalorder %s14, 3
      %p27 = por %p25, %p26
      %p28 = scmp.ne.s32.totalorder %s19, %s20
      %p29 = scmp.eq.s32.totalorder %s14, 0
      %p30 = por %p28, %p29
      %p31 = scmp.ne.s32.totalorder %s19, %s20
      %p32 = scmp.eq.s32.totalorder %s15, 3
      %p33 = por %p31, %p32
      %p35 = scmp.ne.s32.totalorder %s20, %s34
      %p36 = scmp.eq.s32.totalorder %s15, 0
      %p37 = por %p35, %p36
      %s39 = sadd.s32 %s38, 1
      %p42 = scmp.eq.s32.totalorder %s9, 3
      %p43 = scmp.ne.s32.totalorder %s38, %s40
      %p44 = scmp.eq.s32.totalorder %s9, 0
      %p45 = por %p43, %p44
      %p46 = scmp.ne.s32.totalorder %s38, %s40
      %p47 = scmp.eq.s32.totalorder %s14, 3
      %p48 = por %p46, %p47
      %p49 = scmp.ne.s32.totalorder %s40, %s41
      %p50 = scmp.eq.s32.totalorder %s14, 0
      %p51 = por %p49, %p50
      %p52 = scmp.ne.s32.totalorder %s40, %s41
      %p53 = scmp.eq.s32.totalorder %s15, 3
      %p54 = por %p52, %p53
      %p56 = scmp.ne.s32.totalorder %s41, %s55
      %p57 = scmp.eq.s32.totalorder %s15, 0
      %p58 = por %p56, %p57
      %s60 = sadd.s32 %s59, 1
      %p63 = scmp.eq.s32.totalorder %s9, 3
      %p64 = scmp.ne.s32.totalorder %s59, %s61
      %p65 = scmp.eq.s32.totalorder %s9, 0
      %p66 = por %p64, %p65
      %p67 = scmp.ne.s32.totalorder %s59, %s61
      %p68 = scmp.eq.s32.totalorder %s14, 3
      %p69 = por %p67, %p68
      %p70 = scmp.ne.s32.totalorder %s61, %s62
      %p71 = scmp.eq.s32.totalorder %s14, 0
      %p72 = por %p70, %p71
      %p73 = scmp.ne.s32.totalorder %s61, %s62
      %p74 = scmp.eq.s32.totalorder %s15, 3
      %p75 = por %p73, %p74
      %p77 = scmp.ne.s32.totalorder %s62, %s76
      %p78 = scmp.eq.s32.totalorder %s15, 0
      %p79 = por %p77, %p78
      %s80 = ssub.s32 %s9, %s16
      %p81 = scmp.eq.s32.totalorder %s80, 0
      %s83 = sadd.s32 %s82, 1
      %s84 = scalar_select %p81, %s82, %s83
      %p87 = pneg %p81
      %p88 = scmp.eq.s32.totalorder %s9, 3
      %p89 = por %p87, %p88
      %p90 = scmp.ne.s32.totalorder %s82, %s85
      %p91 = scmp.eq.s32.totalorder %s9, 0
      %p92 = por %p90, %p91
      %p93 = scmp.ne.s32.totalorder %s82, %s85
      %p94 = scmp.eq.s32.totalorder %s14, 3
      %p95 = por %p93, %p94
      %p96 = scmp.ne.s32.totalorder %s85, %s86
      %p97 = scmp.eq.s32.totalorder %s14, 0
      %p98 = por %p96, %p97
      %p99 = scmp.ne.s32.totalorder %s85, %s86
      %p100 = scmp.eq.s32.totalorder %s15, 3
      %p101 = por %p99, %p100
      %p103 = scmp.ne.s32.totalorder %s86, %s102
      %p104 = scmp.eq.s32.totalorder %s15, 0
      %p105 = por %p103, %p104
      %p106 = scmp.le.s32.totalorder 1, %s9
      %p107 = scmp.lt.s32.totalorder %s9, 5
      %p108 = pnand %p106, %p107
      %p109 = pneg %p108
      // Predicated region
      $region9: #{conv2d_pallas.1} parent=5 // pred_check
        _
      $region10: #{conv2d_pallas.1} parent=5 // pred_check_branch
        %111 = sbr.rel (%p108) target = $region12
      $region11: #{conv2d_pallas.1} parent=5 // pred_region
        %s112 = ssub.s32 %s9, 1
        // Predicated region
        $region13: #{conv2d_pallas.1} parent=11 // pred_check
          %p113 = pneg %p30
        $region14: #{conv2d_pallas.1} parent=11 // pred_check_branch
          %115 = sbr.rel (%p113) target = $region16
        $region15: #{conv2d_pallas.1} parent=11 // pred_region
          _
        $region16: #{conv2d_pallas.1} parent=11 // pred_fallthru
          _
        // Predicated region
        $region17: #{conv2d_pallas.1} parent=11 // pred_check
          %p116 = pneg %p51
        $region18: #{conv2d_pallas.1} parent=11 // pred_check_branch
          %118 = sbr.rel (%p116) target = $region20
        $region19: #{conv2d_pallas.1} parent=11 // pred_region
          _
        $region20: #{conv2d_pallas.1} parent=11 // pred_fallthru
          _
        // Predicated region
        $region21: #{conv2d_pallas.1} parent=11 // pred_check
          %p119 = pneg %p72
        $region22: #{conv2d_pallas.1} parent=11 // pred_check_branch
          %121 = sbr.rel (%p119) target = $region24
        $region23: #{conv2d_pallas.1} parent=11 // pred_region
          _
        $region24: #{conv2d_pallas.1} parent=11 // pred_fallthru
          _
      $region12: #{conv2d_pallas.1} parent=5 // pred_fallthru
        _
      %p122 = scmp.lt.s32.totalorder %s9, 4
      // Predicated region
      $region25: #{conv2d_pallas.1} parent=5 // pred_check
        %p123 = pneg %p122
      $region26: #{conv2d_pallas.1} parent=5 // pred_check_branch
        %125 = sbr.rel (%p123) target = $region28
      $region27: #{conv2d_pallas.1} parent=5 // pred_region
        _
      $region28: #{conv2d_pallas.1} parent=5 // pred_fallthru
        _
      %p126 = scmp.le.s32.totalorder 1, %s9
      %p127 = scmp.lt.s32.totalorder %s9, 5
      %p128 = pnand %p126, %p127
      %p129 = pneg %p128
      // Predicated region
      $region29: #{conv2d_pallas.1} parent=5 // pred_check
        _
      $region30: #{conv2d_pallas.1} parent=5 // pred_check_branch
        %131 = sbr.rel (%p128) target = $region32
      $region31: #{conv2d_pallas.1} parent=5 // pred_region
        %s132 = ssub.s32 %s9, 1
        %p133 = pneg %p30
        %p134 = pneg %p27
        %p135 = pneg %p51
        %p136 = pneg %p48
        %p137 = pneg %p72
        %p138 = pneg %p69
        %p139 = pneg %p98
        %p140 = pneg %p95
        %s141 = sand.u32 %s85, 1
        %s142 = sand.u32 %s85, 1
        %s143 = smul.addr %s142, 64
        %s144 = scalar_lea.vmem [#allocation2], %s143
        %s145 = smul.u32 4, %s14
        %s147 = smul.u32 %s14, 512
        %s148 = sshra.s32 %s147, 7
        %s149 = sand.u32 %s147, 127
        %s150 = smul.addr %s148, 2
        %s151 = scalar_lea.vmem %s0, %s150
        %v152 = vld [vmem:[%s151] sm:$0xff]
        %v153 = vld [vmem:[%s151 + $0x8] sm:$0x3]
        %v154 = vld [vmem:[%s1] sm:$0xf]
        %v155 = vld [vmem:[%s1 + $0x4] sm:$0xf]
        %s156 = scalar_lea.vmem %s1, 8
        %v157 = vld [vmem:[%s156] sm:$0xf]
        %v158 = vld [vmem:[%s156 + $0x4] sm:$0xf]
        %v161 = vunpack.c.l.b16 %v157
        %v162 = vunpack.c.l.b16 %v158
        %v163 = vpack.c.b16 %v162, %v161
        %v166 = vcombine.high %v152, %v152
        %v168 = vunpack.c.l.s4 1983009808
        %v169 = vunpack.c.0.s8 %v168
        %v170 = vlaneseq
        %v171 = vshrl.u32 %v170, 7
        %v172 = vsub.s32 %v169, %v171
        %v173 = vrot.slane %v152, %v172
        %v175 = vunpack.c.l.s4 1983009808
        %v176 = vunpack.c.0.s8 %v175
        %v177 = vlaneseq
        %v178 = vshrl.u32 %v177, 7
        %v179 = vsub.s32 %v176, %v178
        %v180 = vrot.slane %v166, %v179
        %v181 = vcombine.high %v173, %v173
        %v182 = vcombine.high %v180, %v180
        %v184 = vunpack.c.l.s4 1983009808
        %v185 = vunpack.c.0.s8 %v184
        %v186 = vlaneseq
        %v187 = vshrl.u32 %v186, 7
        %v188 = vsub.s32 %v185, %v187
        %v189 = vrot.slane %v153, %v188
        %190 = vrot.lane.b32.xlu0 %v173, 127
        %v191 = vpop.permute.xlu0 %190
        %192 = vrot.lane.b32.xlu0 %v181, 127
        %v193 = vpop.permute.xlu0 %192
        %194 = vrot.lane.b32.xlu0 %v180, 127
        %v195 = vpop.permute.xlu0 %194
        %196 = vrot.lane.b32.xlu0 %v182, 127
        %v197 = vpop.permute.xlu0 %196
        %198 = vrot.lane.b32.xlu0 %v189, 127
        %v199 = vpop.permute.xlu0 %198
        %vm200 = vcmask 1039360
        %v201 = vsel %vm200, %v191, %v193
        %v202 = vsel %vm200, %v193, %v195
        %v203 = vsel %vm200, %v195, %v197
        %v204 = vsel %vm200, %v197, %v199
        %vm205 = vcmask 31744
        %v207 = vsel %vm205, %v163, 0
        %vm209 = vcmask 1041408
        %v211 = vsel %vm209, %v201, 0
        %v214 = vsel %vm209, %v202, 0
        %v217 = vsel %vm209, %v203, 0
        %v220 = vsel %vm209, %v204, 0
        %222 = vmatprep.subr.bf16.mxu0 %v214
        %223 = vmatpush1.bf16.msra.mxu0 %v211
        %224 = vmatprep.subr.bf16.mxu0 0
        %225 = vmatpush1.bf16.msra.mxu0 0
        %226 = vmatprep.subr.bf16.mxu0 0
        %227 = vmatpush1.bf16.msra.mxu0 0
        %228 = vmatprep.subr.bf16.mxu0 0
        %229 = vmatpush1.bf16.msra.mxu0 0
        %230 = vmatprep.subr.bf16.mxu0 0
        %231 = vmatpush1.bf16.msra.mxu0 0
        %232 = vmatprep.subr.bf16.mxu0 0
        %233 = vmatpush1.bf16.msra.mxu0 0
        %234 = vmatprep.subr.bf16.mxu0 0
        %235 = vmatpush1.bf16.msra.mxu0 0
        %236 = vmatprep.subr.bf16.mxu0 0
        %237 = vmatpush1.bf16.msra.mxu0 0
        %238 = vmatprep.subr.bf16.mxu0 0
        %239 = vmatpush1.bf16.msra.mxu0 0
        %240 = vmatprep.subr.bf16.mxu0 0
        %241 = vmatpush1.bf16.msra.mxu0 0
        %242 = vmatprep.subr.bf16.mxu0 0
        %243 = vmatpush1.bf16.msra.mxu0 0
        %244 = vmatprep.subr.bf16.mxu0 0
        %245 = vmatpush1.bf16.msra.mxu0 0
        %246 = vmatprep.subr.bf16.mxu0 0
        %247 = vmatpush1.bf16.msra.mxu0 0
        %248 = vmatprep.subr.bf16.mxu0 0
        %249 = vmatpush1.bf16.msra.mxu0 0
        %250 = vmatprep.subr.bf16.mxu0 0
        %251 = vmatpush1.bf16.msra.mxu0 0
        %252 = vmatprep.subr.bf16.mxu0 0
        %253 = vmatpush1.bf16.msra.mxu0 0
        %254 = vmatprep.mubr.bf16.mxu0 0
        %255 = vmatmul.mubr.bf16.gmra.mrb[0].mxu0 %v207
        %v256 = vpop.f32.mrb[0].mxu0
        %v257 = vadd.f32 0.0, %v256
        %v258 = vpop.f32.mrb[0].mxu0
        %v259 = vadd.f32 0.0, %v258
        %v260 = vpop.f32.mrb[0].mxu0
        %v261 = vadd.f32 0.0, %v260
        %v262 = vpop.f32.mrb[0].mxu0
        %v263 = vadd.f32 0.0, %v262
        %264 = vdwg.mxu0
        %265 = vmatprep.subr.bf16.mxu0 %v220
        %266 = vmatpush1.bf16.msra.mxu0 %v217
        %267 = vmatprep.subr.bf16.mxu0 0
        %268 = vmatpush1.bf16.msra.mxu0 0
        %269 = vmatprep.subr.bf16.mxu0 0
        %270 = vmatpush1.bf16.msra.mxu0 0
        %271 = vmatprep.subr.bf16.mxu0 0
        %272 = vmatpush1.bf16.msra.mxu0 0
        %273 = vmatprep.subr.bf16.mxu0 0
        %274 = vmatpush1.bf16.msra.mxu0 0
        %275 = vmatprep.subr.bf16.mxu0 0
        %276 = vmatpush1.bf16.msra.mxu0 0
        %277 = vmatprep.subr.bf16.mxu0 0
        %278 = vmatpush1.bf16.msra.mxu0 0
        %279 = vmatprep.subr.bf16.mxu0 0
        %280 = vmatpush1.bf16.msra.mxu0 0
        %281 = vmatprep.subr.bf16.mxu0 0
        %282 = vmatpush1.bf16.msra.mxu0 0
        %283 = vmatprep.subr.bf16.mxu0 0
        %284 = vmatpush1.bf16.msra.mxu0 0
        %285 = vmatprep.subr.bf16.mxu0 0
        %286 = vmatpush1.bf16.msra.mxu0 0
        %287 = vmatprep.subr.bf16.mxu0 0
        %288 = vmatpush1.bf16.msra.mxu0 0
        %289 = vmatprep.subr.bf16.mxu0 0
        %290 = vmatpush1.bf16.msra.mxu0 0
        %291 = vmatprep.subr.bf16.mxu0 0
        %292 = vmatpush1.bf16.msra.mxu0 0
        %293 = vmatprep.subr.bf16.mxu0 0
        %294 = vmatpush1.bf16.msra.mxu0 0
        %295 = vmatprep.subr.bf16.mxu0 0
        %296 = vmatpush1.bf16.msra.mxu0 0
        %297 = vmatprep.mubr.bf16.mxu0 0
        %298 = vmatmul.mubr.bf16.gmra.mrb[0].mxu0 %v207
        %v299 = vpop.f32.mrb[0].mxu0
        %v300 = vadd.f32 0.0, %v299
        %v301 = vpop.f32.mrb[0].mxu0
        %v302 = vadd.f32 0.0, %v301
        %v303 = vpop.f32.mrb[0].mxu0
        %v304 = vadd.f32 0.0, %v303
        %v305 = vpop.f32.mrb[0].mxu0
        %v306 = vadd.f32 0.0, %v305
        %307 = vdwg.mxu0
        %v310 = vunpack.c.l.b16 %v154
        %v311 = vunpack.c.l.b16 %v155
        %v312 = vpack.c.b16 %v311, %v310
        %v314 = vsel %vm205, %v312, 0
        %v317 = vsel %vm209, %v173, 0
        %v320 = vsel %vm209, %v181, 0
        %v323 = vsel %vm209, %v180, 0
        %v326 = vsel %vm209, %v182, 0
        %328 = vmatprep.subr.bf16.mxu0 %v320
        %329 = vmatpush1.bf16.msra.mxu0 %v317
        %330 = vmatprep.subr.bf16.mxu0 0
        %331 = vmatpush1.bf16.msra.mxu0 0
        %332 = vmatprep.subr.bf16.mxu0 0
        %333 = vmatpush1.bf16.msra.mxu0 0
        %334 = vmatprep.subr.bf16.mxu0 0
        %335 = vmatpush1.bf16.msra.mxu0 0
        %336 = vmatprep.subr.bf16.mxu0 0
        %337 = vmatpush1.bf16.msra.mxu0 0
        %338 = vmatprep.subr.bf16.mxu0 0
        %339 = vmatpush1.bf16.msra.mxu0 0
        %340 = vmatprep.subr.bf16.mxu0 0
        %341 = vmatpush1.bf16.msra.mxu0 0
        %342 = vmatprep.subr.bf16.mxu0 0
        %343 = vmatpush1.bf16.msra.mxu0 0
        %344 = vmatprep.subr.bf16.mxu0 0
        %345 = vmatpush1.bf16.msra.mxu0 0
        %346 = vmatprep.subr.bf16.mxu0 0
        %347 = vmatpush1.bf16.msra.mxu0 0
        %348 = vmatprep.subr.bf16.mxu0 0
        %349 = vmatpush1.bf16.msra.mxu0 0
        %350 = vmatprep.subr.bf16.mxu0 0
        %351 = vmatpush1.bf16.msra.mxu0 0
        %352 = vmatprep.subr.bf16.mxu0 0
        %353 = vmatpush1.bf16.msra.mxu0 0
        %354 = vmatprep.subr.bf16.mxu0 0
        %355 = vmatpush1.bf16.msra.mxu0 0
        %356 = vmatprep.subr.bf16.mxu0 0
        %357 = vmatpush1.bf16.msra.mxu0 0
        %358 = vmatprep.subr.bf16.mxu0 0
        %359 = vmatpush1.bf16.msra.mxu0 0
        %360 = vmatprep.mubr.bf16.mxu0 0
        %361 = vmatmul.mubr.bf16.gmra.mrb[0].mxu0 %v314
        %v362 = vpop.f32.mrb[0].mxu0
        %v363 = vadd.f32 %v257, %v362
        %v364 = vpop.f32.mrb[0].mxu0
        %v365 = vadd.f32 %v259, %v364
        %v366 = vpop.f32.mrb[0].mxu0
        %v367 = vadd.f32 %v261, %v366
        %v368 = vpop.f32.mrb[0].mxu0
        %v369 = vadd.f32 %v263, %v368
        %370 = vdwg.mxu0
        %371 = vmatprep.subr.bf16.mxu0 %v326
        %372 = vmatpush1.bf16.msra.mxu0 %v323
        %373 = vmatprep.subr.bf16.mxu0 0
        %374 = vmatpush1.bf16.msra.mxu0 0
        %375 = vmatprep.subr.bf16.mxu0 0
        %376 = vmatpush1.bf16.msra.mxu0 0
        %377 = vmatprep.subr.bf16.mxu0 0
        %378 = vmatpush1.bf16.msra.mxu0 0
        %379 = vmatprep.subr.bf16.mxu0 0
        %380 = vmatpush1.bf16.msra.mxu0 0
        %381 = vmatprep.subr.bf16.mxu0 0
        %382 = vmatpush1.bf16.msra.mxu0 0
        %383 = vmatprep.subr.bf16.mxu0 0
        %384 = vmatpush1.bf16.msra.mxu0 0
        %385 = vmatprep.subr.bf16.mxu0 0
        %386 = vmatpush1.bf16.msra.mxu0 0
        %387 = vmatprep.subr.bf16.mxu0 0
        %388 = vmatpush1.bf16.msra.mxu0 0
        %389 = vmatprep.subr.bf16.mxu0 0
        %390 = vmatpush1.bf16.msra.mxu0 0
        %391 = vmatprep.subr.bf16.mxu0 0
        %392 = vmatpush1.bf16.msra.mxu0 0
        %393 = vmatprep.subr.bf16.mxu0 0
        %394 = vmatpush1.bf16.msra.mxu0 0
        %395 = vmatprep.subr.bf16.mxu0 0
        %396 = vmatpush1.bf16.msra.mxu0 0
        %397 = vmatprep.subr.bf16.mxu0 0
        %398 = vmatpush1.bf16.msra.mxu0 0
        %399 = vmatprep.subr.bf16.mxu0 0
        %400 = vmatpush1.bf16.msra.mxu0 0
        %401 = vmatprep.subr.bf16.mxu0 0
        %402 = vmatpush1.bf16.msra.mxu0 0
        %403 = vmatprep.mubr.bf16.mxu0 0
        %404 = vmatmul.mubr.bf16.gmra.mrb[0].mxu0 %v314
        %v405 = vpop.f32.mrb[0].mxu0
        %v406 = vadd.f32 %v300, %v405
        %v407 = vpop.f32.mrb[0].mxu0
        %v408 = vadd.f32 %v302, %v407
        %v409 = vpop.f32.mrb[0].mxu0
        %v410 = vadd.f32 %v304, %v409
        %v411 = vpop.f32.mrb[0].mxu0
        %v412 = vadd.f32 %v306, %v411
        %413 = vdwg.mxu0
        %s414 = scalar_lea.vmem %s1, 16
        %v415 = vld [vmem:[%s414] sm:$0xf]
        %v416 = vld [vmem:[%s414 + $0x4] sm:$0xf]
        %v419 = vunpack.c.l.b16 %v415
        %v420 = vunpack.c.l.b16 %v416
        %v421 = vpack.c.b16 %v420, %v419
        %422 = vrot.lane.b32.xlu0 %v173, 126
        %v423 = vpop.permute.xlu0 %422
        %424 = vrot.lane.b32.xlu0 %v181, 126
        %v425 = vpop.permute.xlu0 %424
        %426 = vrot.lane.b32.xlu0 %v180, 126
        %v427 = vpop.permute.xlu0 %426
        %428 = vrot.lane.b32.xlu0 %v182, 126
        %v429 = vpop.permute.xlu0 %428
        %430 = vrot.lane.b32.xlu0 %v189, 126
        %v431 = vpop.permute.xlu0 %430
        %vm432 = vcmask 1031168
        %v433 = vsel %vm432, %v423, %v425
        %v434 = vsel %vm432, %v425, %v427
        %v435 = vsel %vm432, %v427, %v429
        %v436 = vsel %vm432, %v429, %v431
        %v438 = vsel %vm205, %v421, 0
        %v441 = vsel %vm209, %v433, 0
        %v444 = vsel %vm209, %v434, 0
        %v447 = vsel %vm209, %v435, 0
        %v450 = vsel %vm209, %v436, 0
        %452 = vmatprep.subr.bf16.mxu0 %v444
        %453 = vmatpush1.bf16.msra.mxu0 %v441
        %454 = vmatprep.subr.bf16.mxu0 0
        %455 = vmatpush1.bf16.msra.mxu0 0
        %456 = vmatprep.subr.bf16.mxu0 0
        %457 = vmatpush1.bf16.msra.mxu0 0
        %458 = vmatprep.subr.bf16.mxu0 0
        %459 = vmatpush1.bf16.msra.mxu0 0
        %460 = vmatprep.subr.bf16.mxu0 0
        %461 = vmatpush1.bf16.msra.mxu0 0
        %462 = vmatprep.subr.bf16.mxu0 0
        %463 = vmatpush1.bf16.msra.mxu0 0
        %464 = vmatprep.subr.bf16.mxu0 0
        %465 = vmatpush1.bf16.msra.mxu0 0
        %466 = vmatprep.subr.bf16.mxu0 0
        %467 = vmatpush1.bf16.msra.mxu0 0
        %468 = vmatprep.subr.bf16.mxu0 0
        %469 = vmatpush1.bf16.msra.mxu0 0
        %470 = vmatprep.subr.bf16.mxu0 0
        %471 = vmatpush1.bf16.msra.mxu0 0
        %472 = vmatprep.subr.bf16.mxu0 0
        %473 = vmatpush1.bf16.msra.mxu0 0
        %474 = vmatprep.subr.bf16.mxu0 0
        %475 = vmatpush1.bf16.msra.mxu0 0
        %476 = vmatprep.subr.bf16.mxu0 0
        %477 = vmatpush1.bf16.msra.mxu0 0
        %478 = vmatprep.subr.bf16.mxu0 0
        %479 = vmatpush1.bf16.msra.mxu0 0
        %480 = vmatprep.subr.bf16.mxu0 0
        %481 = vmatpush1.bf16.msra.mxu0 0
        %482 = vmatprep.subr.bf16.mxu0 0
        %483 = vmatpush1.bf16.msra.mxu0 0
        %484 = vmatprep.mubr.bf16.mxu0 0
        %485 = vmatmul.mubr.bf16.gmra.mrb[0].mxu0 %v438
        %v486 = vpop.f32.mrb[0].mxu0
        %v487 = vadd.f32 0.0, %v486
        %v488 = vpop.f32.mrb[0].mxu0
        %v489 = vadd.f32 0.0, %v488
        %v490 = vpop.f32.mrb[0].mxu0
        %v491 = vadd.f32 0.0, %v490
        %v492 = vpop.f32.mrb[0].mxu0
        %v493 = vadd.f32 0.0, %v492
        %494 = vdwg.mxu0
        %495 = vmatprep.subr.bf16.mxu0 %v450
        %496 = vmatpush1.bf16.msra.mxu0 %v447
        %497 = vmatprep.subr.bf16.mxu0 0
        %498 = vmatpush1.bf16.msra.mxu0 0
        %499 = vmatprep.subr.bf16.mxu0 0
        %500 = vmatpush1.bf16.msra.mxu0 0
        %501 = vmatprep.subr.bf16.mxu0 0
        %502 = vmatpush1.bf16.msra.mxu0 0
        %503 = vmatprep.subr.bf16.mxu0 0
        %504 = vmatpush1.bf16.msra.mxu0 0
        %505 = vmatprep.subr.bf16.mxu0 0
        %506 = vmatpush1.bf16.msra.mxu0 0
        %507 = vmatprep.subr.bf16.mxu0 0
        %508 = vmatpush1.bf16.msra.mxu0 0
        %509 = vmatprep.subr.bf16.mxu0 0
        %510 = vmatpush1.bf16.msra.mxu0 0
        %511 = vmatprep.subr.bf16.mxu0 0
        %512 = vmatpush1.bf16.msra.mxu0 0
        %513 = vmatprep.subr.bf16.mxu0 0
        %514 = vmatpush1.bf16.msra.mxu0 0
        %515 = vmatprep.subr.bf16.mxu0 0
        %516 = vmatpush1.bf16.msra.mxu0 0
        %517 = vmatprep.subr.bf16.mxu0 0
        %518 = vmatpush1.bf16.msra.mxu0 0
        %519 = vmatprep.subr.bf16.mxu0 0
        %520 = vmatpush1.bf16.msra.mxu0 0
        %521 = vmatprep.subr.bf16.mxu0 0
        %522 = vmatpush1.bf16.msra.mxu0 0
        %523 = vmatprep.subr.bf16.mxu0 0
        %524 = vmatpush1.bf16.msra.mxu0 0
        %525 = vmatprep.subr.bf16.mxu0 0
        %526 = vmatpush1.bf16.msra.mxu0 0
        %527 = vmatprep.mubr.bf16.mxu0 0
        %528 = vmatmul.mubr.bf16.gmra.mrb[0].mxu0 %v438
        %v529 = vpop.f32.mrb[0].mxu0
        %v530 = vadd.f32 0.0, %v529
        %v531 = vpop.f32.mrb[0].mxu0
        %v532 = vadd.f32 0.0, %v531
        %v533 = vpop.f32.mrb[0].mxu0
        %v534 = vadd.f32 0.0, %v533
        %v535 = vpop.f32.mrb[0].mxu0
        %v536 = vadd.f32 0.0, %v535
        %537 = vdwg.mxu0
        %v538 = vadd.f32 %v363, %v487
        %v539 = vadd.f32 %v365, %v489
        %v540 = vadd.f32 %v406, %v530
        %v541 = vadd.f32 %v408, %v532
        %v542 = vadd.f32 %v367, %v491
        %v543 = vadd.f32 %v369, %v493
        %v544 = vadd.f32 %v410, %v534
        %v545 = vadd.f32 %v412, %v536
        %s546 = sadd.s32 %s147, 128
        %s547 = sshra.s32 %s546, 7
        %s548 = sand.u32 %s546, 127
        %s549 = smul.addr %s547, 2
        %s550 = scalar_lea.vmem %s0, %s549
        %v551 = vld [vmem:[%s550] sm:$0xff]
        %v552 = vld [vmem:[%s550 + $0x8] sm:$0x3]
        %s553 = scalar_lea.vmem %s1, 24
        %v554 = vld [vmem:[%s553] sm:$0xf]
        %v555 = vld [vmem:[%s553 + $0x4] sm:$0xf]
        %v558 = vunpack.c.l.b16 %v554
        %v559 = vunpack.c.l.b16 %v555
        %v560 = vpack.c.b16 %v559, %v558
        %v562 = vcombine.high %v551, %v551
        %v564 = vunpack.c.l.s4 1983009808
        %v565 = vunpack.c.0.s8 %v564
        %v566 = vlaneseq
        %v567 = vshrl.u32 %v566, 7
        %v568 = vsub.s32 %v565, %v567
        %v569 = vrot.slane %v551, %v568
        %v571 = vunpack.c.l.s4 1983009808
        %v572 = vunpack.c.0.s8 %v571
        %v573 = vlaneseq
        %v574 = vshrl.u32 %v573, 7
        %v575 = vsub.s32 %v572, %v574
        %v576 = vrot.slane %v562, %v575
        %v577 = vcombine.high %v569, %v569
        %v578 = vcombine.high %v576, %v576
        %v580 = vsel %vm205, %v560, 0
        %v583 = vsel %vm209, %v569, 0
        %v586 = vsel %vm209, %v577, 0
        %v589 = vsel %vm209, %v576, 0
        %v592 = vsel %vm209, %v578, 0
        %594 = vmatprep.subr.bf16.mxu0 %v586
        %595 = vmatpush1.bf16.msra.mxu0 %v583
        %596 = vmatprep.subr.bf16.mxu0 0
        %597 = vmatpush1.bf16.msra.mxu0 0
        %598 = vmatprep.subr.bf16.mxu0 0
        %599 = vmatpush1.bf16.msra.mxu0 0
        %600 = vmatprep.subr.bf16.mxu0 0
        %601 = vmatpush1.bf16.msra.mxu0 0
        %602 = vmatprep.subr.bf16.mxu0 0
        %603 = vmatpush1.bf16.msra.mxu0 0
        %604 = vmatprep.subr.bf16.mxu0 0
        %605 = vmatpush1.bf16.msra.mxu0 0
        %606 = vmatprep.subr.bf16.mxu0 0
        %607 = vmatpush1.bf16.msra.mxu0 0
        %608 = vmatprep.subr.bf16.mxu0 0
        %609 = vmatpush1.bf16.msra.mxu0 0
        %610 = vmatprep.subr.bf16.mxu0 0
        %611 = vmatpush1.bf16.msra.mxu0 0
        %612 = vmatprep.subr.bf16.mxu0 0
        %613 = vmatpush1.bf16.msra.mxu0 0
        %614 = vmatprep.subr.bf16.mxu0 0
        %615 = vmatpush1.bf16.msra.mxu0 0
        %616 = vmatprep.subr.bf16.mxu0 0
        %617 = vmatpush1.bf16.msra.mxu0 0
        %618 = vmatprep.subr.bf16.mxu0 0
        %619 = vmatpush1.bf16.msra.mxu0 0
        %620 = vmatprep.subr.bf16.mxu0 0
        %621 = vmatpush1.bf16.msra.mxu0 0
        %622 = vmatprep.subr.bf16.mxu0 0
        %623 = vmatpush1.bf16.msra.mxu0 0
        %624 = vmatprep.subr.bf16.mxu0 0
        %625 = vmatpush1.bf16.msra.mxu0 0
        %626 = vmatprep.mubr.bf16.mxu0 0
        %627 = vmatmul.mubr.bf16.gmra.mrb[0].mxu0 %v580
        %v628 = vpop.f32.mrb[0].mxu0
        %v629 = vadd.f32 0.0, %v628
        %v630 = vpop.f32.mrb[0].mxu0
        %v631 = vadd.f32 0.0, %v630
        %v632 = vpop.f32.mrb[0].mxu0
        %v633 = vadd.f32 0.0, %v632
        %v634 = vpop.f32.mrb[0].mxu0
        %v635 = vadd.f32 0.0, %v634
        %636 = vdwg.mxu0
        %637 = vmatprep.subr.bf16.mxu0 %v592
        %638 = vmatpush1.bf16.msra.mxu0 %v589
        %639 = vmatprep.subr.bf16.mxu0 0
        %640 = vmatpush1.bf16.msra.mxu0 0
        %641 = vmatprep.subr.bf16.mxu0 0
        %642 = vmatpush1.bf16.msra.mxu0 0
        %643 = vmatprep.subr.bf16.mxu0 0
        %644 = vmatpush1.bf16.msra.mxu0 0
        %645 = vmatprep.subr.bf16.mxu0 0
        %646 = vmatpush1.bf16.msra.mxu0 0
        %647 = vmatprep.subr.bf16.mxu0 0
        %648 = vmatpush1.bf16.msra.mxu0 0
        %649 = vmatprep.subr.bf16.mxu0 0
        %650 = vmatpush1.bf16.msra.mxu0 0
        %651 = vmatprep.subr.bf16.mxu0 0
        %652 = vmatpush1.bf16.msra.mxu0 0
        %653 = vmatprep.subr.bf16.mxu0 0
        %654 = vmatpush1.bf16.msra.mxu0 0
        %655 = vmatprep.subr.bf16.mxu0 0
        %656 = vmatpush1.bf16.msra.mxu0 0
        %657 = vmatprep.subr.bf16.mxu0 0
        %658 = vmatpush1.bf16.msra.mxu0 0
        %659 = vmatprep.subr.bf16.mxu0 0
        %660 = vmatpush1.bf16.msra.mxu0 0
        %661 = vmatprep.subr.bf16.mxu0 0
        %662 = vmatpush1.bf16.msra.mxu0 0
        %663 = vmatprep.subr.bf16.mxu0 0
        %664 = vmatpush1.bf16.msra.mxu0 0
        %665 = vmatprep.subr.bf16.mxu0 0
        %666 = vmatpush1.bf16.msra.mxu0 0
        %667 = vmatprep.subr.bf16.mxu0 0
        %668 = vmatpush1.bf16.msra.mxu0 0
        %669 = vmatprep.mubr.bf16.mxu0 0
        %670 = vmatmul.mubr.bf16.gmra.mrb[0].mxu0 %v580
        %v671 = vpop.f32.mrb[0].mxu0
        %v672 = vadd.f32 0.0, %v671
        %v673 = vpop.f32.mrb[0].mxu0
        %v674 = vadd.f32 0.0, %v673
        %v675 = vpop.f32.mrb[0].mxu0
        %v676 = vadd.f32 0.0, %v675
        %v677 = vpop.f32.mrb[0].mxu0
        %v678 = vadd.f32 0.0, %v677
        %679 = vdwg.mxu0
        %v680 = vadd.f32 %v538, %v629
        %v681 = vadd.f32 %v539, %v631
        %v682 = vadd.f32 %v540, %v672
        %v683 = vadd.f32 %v541, %v674
        %v684 = vadd.f32 %v542, %v633
        %v685 = vadd.f32 %v543, %v635
        %v686 = vadd.f32 %v544, %v676
        %v687 = vadd.f32 %v545, %v678
        %s688 = scalar_lea.vmem %s1, 32
        %v689 = vld [vmem:[%s688] sm:$0xf]
        %v690 = vld [vmem:[%s688 + $0x4] sm:$0xf]
        %v693 = vunpack.c.l.b16 %v689
        %v694 = vunpack.c.l.b16 %v690
        %v695 = vpack.c.b16 %v694, %v693
        %v698 = vunpack.c.l.s4 1983009808
        %v699 = vunpack.c.0.s8 %v698
        %v700 = vlaneseq
        %v701 = vshrl.u32 %v700, 7
        %v702 = vsub.s32 %v699, %v701
        %v703 = vrot.slane %v552, %v702
        %704 = vrot.lane.b32.xlu0 %v569, 127
        %v705 = vpop.permute.xlu0 %704
        %706 = vrot.lane.b32.xlu0 %v577, 127
        %v707 = vpop.permute.xlu0 %706
        %708 = vrot.lane.b32.xlu0 %v576, 127
        %v709 = vpop.permute.xlu0 %708
        %710 = vrot.lane.b32.xlu0 %v578, 127
        %v711 = vpop.permute.xlu0 %710
        %712 = vrot.lane.b32.xlu0 %v703, 127
        %v713 = vpop.permute.xlu0 %712
        %v714 = vsel %vm200, %v705, %v707
        %v715 = vsel %vm200, %v707, %v709
        %v716 = vsel %vm200, %v709, %v711
        %v717 = vsel %vm200, %v711, %v713
        %v719 = vsel %vm205, %v695, 0
        %v722 = vsel %vm209, %v714, 0
        %v725 = vsel %vm209, %v715, 0
        %v728 = vsel %vm209, %v716, 0
        %v731 = vsel %vm209, %v717, 0
        %733 = vmatprep.subr.bf16.mxu0 %v725
        %734 = vmatpush1.bf16.msra.mxu0 %v722
        %735 = vmatprep.subr.bf16.mxu0 0
        %736 = vmatpush1.bf16.msra.mxu0 0
        %737 = vmatprep.subr.bf16.mxu0 0
        %738 = vmatpush1.bf16.msra.mxu0 0
        %739 = vmatprep.subr.bf16.mxu0 0
        %740 = vmatpush1.bf16.msra.mxu0 0
        %741 = vmatprep.subr.bf16.mxu0 0
        %742 = vmatpush1.bf16.msra.mxu0 0
        %743 = vmatprep.subr.bf16.mxu0 0
        %744 = vmatpush1.bf16.msra.mxu0 0
        %745 = vmatprep.subr.bf16.mxu0 0
        %746 = vmatpush1.bf16.msra.mxu0 0
        %747 = vmatprep.subr.bf16.mxu0 0
        %748 = vmatpush1.bf16.msra.mxu0 0
        %749 = vmatprep.subr.bf16.mxu0 0
        %750 = vmatpush1.bf16.msra.mxu0 0
        %751 = vmatprep.subr.bf16.mxu0 0
        %752 = vmatpush1.bf16.msra.mxu0 0
        %753 = vmatprep.subr.bf16.mxu0 0
        %754 = vmatpush1.bf16.msra.mxu0 0
        %755 = vmatprep.subr.bf16.mxu0 0
        %756 = vmatpush1.bf16.msra.mxu0 0
        %757 = vmatprep.subr.bf16.mxu0 0
        %758 = vmatpush1.bf16.msra.mxu0 0
        %759 = vmatprep.subr.bf16.mxu0 0
        %760 = vmatpush1.bf16.msra.mxu0 0
        %761 = vmatprep.subr.bf16.mxu0 0
        %762 = vmatpush1.bf16.msra.mxu0 0
        %763 = vmatprep.subr.bf16.mxu0 0
        %764 = vmatpush1.bf16.msra.mxu0 0
        %765 = vmatprep.mubr.bf16.mxu0 0
        %766 = vmatmul.mubr.bf16.gmra.mrb[0].mxu0 %v719
        %v767 = vpop.f32.mrb[0].mxu0
        %v768 = vadd.f32 0.0, %v767
        %v769 = vpop.f32.mrb[0].mxu0
        %v770 = vadd.f32 0.0, %v769
        %v771 = vpop.f32.mrb[0].mxu0
        %v772 = vadd.f32 0.0, %v771
        %v773 = vpop.f32.mrb[0].mxu0
        %v774 = vadd.f32 0.0, %v773
        %775 = vdwg.mxu0
        %776 = vmatprep.subr.bf16.mxu0 %v731
        %777 = vmatpush1.bf16.msra.mxu0 %v728
        %778 = vmatprep.subr.bf16.mxu0 0
        %779 = vmatpush1.bf16.msra.mxu0 0
        %780 = vmatprep.subr.bf16.mxu0 0
        %781 = vmatpush1.bf16.msra.mxu0 0
        %782 = vmatprep.subr.bf16.mxu0 0
        %783 = vmatpush1.bf16.msra.mxu0 0
        %784 = vmatprep.subr.bf16.mxu0 0
        %785 = vmatpush1.bf16.msra.mxu0 0
        %786 = vmatprep.subr.bf16.mxu0 0
        %787 = vmatpush1.bf16.msra.mxu0 0
        %788 = vmatprep.subr.bf16.mxu0 0
        %789 = vmatpush1.bf16.msra.mxu0 0
        %790 = vmatprep.subr.bf16.mxu0 0
        %791 = vmatpush1.bf16.msra.mxu0 0
        %792 = vmatprep.subr.bf16.mxu0 0
        %793 = vmatpush1.bf16.msra.mxu0 0
        %794 = vmatprep.subr.bf16.mxu0 0
        %795 = vmatpush1.bf16.msra.mxu0 0
        %796 = vmatprep.subr.bf16.mxu0 0
        %797 = vmatpush1.bf16.msra.mxu0 0
        %798 = vmatprep.subr.bf16.mxu0 0
        %799 = vmatpush1.bf16.msra.mxu0 0
        %800 = vmatprep.subr.bf16.mxu0 0
        %801 = vmatpush1.bf16.msra.mxu0 0
        %802 = vmatprep.subr.bf16.mxu0 0
        %803 = vmatpush1.bf16.msra.mxu0 0
        %804 = vmatprep.subr.bf16.mxu0 0
        %805 = vmatpush1.bf16.msra.mxu0 0
        %806 = vmatprep.subr.bf16.mxu0 0
        %807 = vmatpush1.bf16.msra.mxu0 0
        %808 = vmatprep.mubr.bf16.mxu0 0
        %809 = vmatmul.mubr.bf16.gmra.mrb[0].mxu0 %v719
        %v810 = vpop.f32.mrb[0].mxu0
        %v811 = vadd.f32 0.0, %v810
        %v812 = vpop.f32.mrb[0].mxu0
        %v813 = vadd.f32 0.0, %v812
        %v814 = vpop.f32.mrb[0].mxu0
        %v815 = vadd.f32 0.0, %v814
        %v816 = vpop.f32.mrb[0].mxu0
        %v817 = vadd.f32 0.0, %v816
        %818 = vdwg.mxu0
        %v819 = vadd.f32 %v680, %v768
        %v820 = vadd.f32 %v681, %v770
        %v821 = vadd.f32 %v682, %v811
        %v822 = vadd.f32 %v683, %v813
        %v823 = vadd.f32 %v684, %v772
        %v824 = vadd.f32 %v685, %v774
        %v825 = vadd.f32 %v686, %v815
        %v826 = vadd.f32 %v687, %v817
        %s827 = scalar_lea.vmem %s1, 40
        %v828 = vld [vmem:[%s827] sm:$0xf]
        %v829 = vld [vmem:[%s827 + $0x4] sm:$0xf]
        %v832 = vunpack.c.l.b16 %v828
        %v833 = vunpack.c.l.b16 %v829
        %v834 = vpack.c.b16 %v833, %v832
        %835 = vrot.lane.b32.xlu0 %v569, 126
        %v836 = vpop.permute.xlu0 %835
        %837 = vrot.lane.b32.xlu0 %v577, 126
        %v838 = vpop.permute.xlu0 %837
        %839 = vrot.lane.b32.xlu0 %v576, 126
        %v840 = vpop.permute.xlu0 %839
        %841 = vrot.lane.b32.xlu0 %v578, 126
        %v842 = vpop.permute.xlu0 %841
        %843 = vrot.lane.b32.xlu0 %v703, 126
        %v844 = vpop.permute.xlu0 %843
        %v845 = vsel %vm432, %v836, %v838
        %v846 = vsel %vm432, %v838, %v840
        %v847 = vsel %vm432, %v840, %v842
        %v848 = vsel %vm432, %v842, %v844
        %v850 = vsel %vm205, %v834, 0
        %v853 = vsel %vm209, %v845, 0
        %v856 = vsel %vm209, %v846, 0
        %v859 = vsel %vm209, %v847, 0
        %v862 = vsel %vm209, %v848, 0
        %864 = vmatprep.subr.bf16.mxu0 %v856
        %865 = vmatpush1.bf16.msra.mxu0 %v853
        %866 = vmatprep.subr.bf16.mxu0 0
        %867 = vmatpush1.bf16.msra.mxu0 0
        %868 = vmatprep.subr.bf16.mxu0 0
        %869 = vmatpush1.bf16.msra.mxu0 0
        %870 = vmatprep.subr.bf16.mxu0 0
        %871 = vmatpush1.bf16.msra.mxu0 0
        %872 = vmatprep.subr.bf16.mxu0 0
        %873 = vmatpush1.bf16.msra.mxu0 0
        %874 = vmatprep.subr.bf16.mxu0 0
        %875 = vmatpush1.bf16.msra.mxu0 0
        %876 = vmatprep.subr.bf16.mxu0 0
        %877 = vmatpush1.bf16.msra.mxu0 0
        %878 = vmatprep.subr.bf16.mxu0 0
        %879 = vmatpush1.bf16.msra.mxu0 0
        %880 = vmatprep.subr.bf16.mxu0 0
        %881 = vmatpush1.bf16.msra.mxu0 0
        %882 = vmatprep.subr.bf16.mxu0 0
        %883 = vmatpush1.bf16.msra.mxu0 0
        %884 = vmatprep.subr.bf16.mxu0 0
        %885 = vmatpush1.bf16.msra.mxu0 0
        %886 = vmatprep.subr.bf16.mxu0 0
        %887 = vmatpush1.bf16.msra.mxu0 0
        %888 = vmatprep.subr.bf16.mxu0 0
        %889 = vmatpush1.bf16.msra.mxu0 0
        %890 = vmatprep.subr.bf16.mxu0 0
        %891 = vmatpush1.bf16.msra.mxu0 0
        %892 = vmatprep.subr.bf16.mxu0 0
        %893 = vmatpush1.bf16.msra.mxu0 0
        %894 = vmatprep.subr.bf16.mxu0 0
        %895 = vmatpush1.bf16.msra.mxu0 0
        %896 = vmatprep.mubr.bf16.mxu0 0
        %897 = vmatmul.mubr.bf16.gmra.mrb[0].mxu0 %v850
        %v898 = vpop.f32.mrb[0].mxu0
        %v899 = vadd.f32 0.0, %v898
        %v900 = vpop.f32.mrb[0].mxu0
        %v901 = vadd.f32 0.0, %v900
        %v902 = vpop.f32.mrb[0].mxu0
        %v903 = vadd.f32 0.0, %v902
        %v904 = vpop.f32.mrb[0].mxu0
        %v905 = vadd.f32 0.0, %v904
        %906 = vdwg.mxu0
        %907 = vmatprep.subr.bf16.mxu0 %v862
        %908 = vmatpush1.bf16.msra.mxu0 %v859
        %909 = vmatprep.subr.bf16.mxu0 0
        %910 = vmatpush1.bf16.msra.mxu0 0
        %911 = vmatprep.subr.bf16.mxu0 0
        %912 = vmatpush1.bf16.msra.mxu0 0
        %913 = vmatprep.subr.bf16.mxu0 0
        %914 = vmatpush1.bf16.msra.mxu0 0
        %915 = vmatprep.subr.bf16.mxu0 0
        %916 = vmatpush1.bf16.msra.mxu0 0
        %917 = vmatprep.subr.bf16.mxu0 0
        %918 = vmatpush1.bf16.msra.mxu0 0
        %919 = vmatprep.subr.bf16.mxu0 0
        %920 = vmatpush1.bf16.msra.mxu0 0
        %921 = vmatprep.subr.bf16.mxu0 0
        %922 = vmatpush1.bf16.msra.mxu0 0
        %923 = vmatprep.subr.bf16.mxu0 0
        %924 = vmatpush1.bf16.msra.mxu0 0
        %925 = vmatprep.subr.bf16.mxu0 0
        %926 = vmatpush1.bf16.msra.mxu0 0
        %927 = vmatprep.subr.bf16.mxu0 0
        %928 = vmatpush1.bf16.msra.mxu0 0
        %929 = vmatprep.subr.bf16.mxu0 0
        %930 = vmatpush1.bf16.msra.mxu0 0
        %931 = vmatprep.subr.bf16.mxu0 0
        %932 = vmatpush1.bf16.msra.mxu0 0
        %933 = vmatprep.subr.bf16.mxu0 0
        %934 = vmatpush1.bf16.msra.mxu0 0
        %935 = vmatprep.subr.bf16.mxu0 0
        %936 = vmatpush1.bf16.msra.mxu0 0
        %937 = vmatprep.subr.bf16.mxu0 0
        %938 = vmatpush1.bf16.msra.mxu0 0
        %939 = vmatprep.mubr.bf16.mxu0 0
        %940 = vmatmul.mubr.bf16.gmra.mrb[0].mxu0 %v850
        %v941 = vpop.f32.mrb[0].mxu0
        %v942 = vadd.f32 0.0, %v941
        %v943 = vpop.f32.mrb[0].mxu0
        %v944 = vadd.f32 0.0, %v943
        %v945 = vpop.f32.mrb[0].mxu0
        %v946 = vadd.f32 0.0, %v945
        %v947 = vpop.f32.mrb[0].mxu0
        %v948 = vadd.f32 0.0, %v947
        %949 = vdwg.mxu0
        %v950 = vadd.f32 %v819, %v899
        %v951 = vadd.f32 %v820, %v901
        %v952 = vadd.f32 %v821, %v942
        %v953 = vadd.f32 %v822, %v944
        %v954 = vadd.f32 %v823, %v903
        %v955 = vadd.f32 %v824, %v905
        %v956 = vadd.f32 %v825, %v946
        %v957 = vadd.f32 %v826, %v948
        %s958 = sadd.s32 %s147, 256
        %s959 = sshra.s32 %s958, 7
        %s960 = sand.u32 %s958, 127
        %s961 = smul.addr %s959, 2
        %s962 = scalar_lea.vmem %s0, %s961
        %v963 = vld [vmem:[%s962] sm:$0xff]
        %v964 = vld [vmem:[%s962 + $0x8] sm:$0x3]
        %s965 = scalar_lea.vmem %s1, 48
        %v966 = vld [vmem:[%s965] sm:$0xf]
        %v967 = vld [vmem:[%s965 + $0x4] sm:$0xf]
        %v970 = vunpack.c.l.b16 %v966
        %v971 = vunpack.c.l.b16 %v967
        %v972 = vpack.c.b16 %v971, %v970
        %v974 = vcombine.high %v963, %v963
        %v976 = vunpack.c.l.s4 1983009808
        %v977 = vunpack.c.0.s8 %v976
        %v978 = vlaneseq
        %v979 = vshrl.u32 %v978, 7
        %v980 = vsub.s32 %v977, %v979
        %v981 = vrot.slane %v963, %v980
        %v983 = vunpack.c.l.s4 1983009808
        %v984 = vunpack.c.0.s8 %v983
        %v985 = vlaneseq
        %v986 = vshrl.u32 %v985, 7
        %v987 = vsub.s32 %v984, %v986
        %v988 = vrot.slane %v974, %v987
        %v989 = vcombine.high %v981, %v981
        %v990 = vcombine.high %v988, %v988
        %v992 = vsel %vm205, %v972, 0
        %v995 = vsel %vm209, %v981, 0
        %v998 = vsel %vm209, %v989, 0
        %v1001 = vsel %vm209, %v988, 0
        %v1004 = vsel %vm209, %v990, 0
        %1006 = vmatprep.subr.bf16.mxu0 %v998
        %1007 = vmatpush1.bf16.msra.mxu0 %v995
        %1008 = vmatprep.subr.bf16.mxu0 0
        %1009 = vmatpush1.bf16.msra.mxu0 0
        %1010 = vmatprep.subr.bf16.mxu0 0
        %1011 = vmatpush1.bf16.msra.mxu0 0
        %1012 = vmatprep.subr.bf16.mxu0 0
        %1013 = vmatpush1.bf16.msra.mxu0 0
        %1014 = vmatprep.subr.bf16.mxu0 0
        %1015 = vmatpush1.bf16.msra.mxu0 0
        %1016 = vmatprep.subr.bf16.mxu0 0
        %1017 = vmatpush1.bf16.msra.mxu0 0
        %1018 = vmatprep.subr.bf16.mxu0 0
        %1019 = vmatpush1.bf16.msra.mxu0 0
        %1020 = vmatprep.subr.bf16.mxu0 0
        %1021 = vmatpush1.bf16.msra.mxu0 0
        %1022 = vmatprep.subr.bf16.mxu0 0
        %1023 = vmatpush1.bf16.msra.mxu0 0
        %1024 = vmatprep.subr.bf16.mxu0 0
        %1025 = vmatpush1.bf16.msra.mxu0 0
        %1026 = vmatprep.subr.bf16.mxu0 0
        %1027 = vmatpush1.bf16.msra.mxu0 0
        %1028 = vmatprep.subr.bf16.mxu0 0
        %1029 = vmatpush1.bf16.msra.mxu0 0
        %1030 = vmatprep.subr.bf16.mxu0 0
        %1031 = vmatpush1.bf16.msra.mxu0 0
        %1032 = vmatprep.subr.bf16.mxu0 0
        %1033 = vmatpush1.bf16.msra.mxu0 0
        %1034 = vmatprep.subr.bf16.mxu0 0
        %1035 = vmatpush1.bf16.msra.mxu0 0
        %1036 = vmatprep.subr.bf16.mxu0 0
        %1037 = vmatpush1.bf16.msra.mxu0 0
        %1038 = vmatprep.mubr.bf16.mxu0 0
        %1039 = vmatmul.mubr.bf16.gmra.mrb[0].mxu0 %v992
        %v1040 = vpop.f32.mrb[0].mxu0
        %v1041 = vadd.f32 0.0, %v1040
        %v1042 = vpop.f32.mrb[0].mxu0
        %v1043 = vadd.f32 0.0, %v1042
        %v1044 = vpop.f32.mrb[0].mxu0
        %v1045 = vadd.f32 0.0, %v1044
        %v1046 = vpop.f32.mrb[0].mxu0
        %v1047 = vadd.f32 0.0, %v1046
        %1048 = vdwg.mxu0
        %1049 = vmatprep.subr.bf16.mxu0 %v1004
        %1050 = vmatpush1.bf16.msra.mxu0 %v1001
        %1051 = vmatprep.subr.bf16.mxu0 0
        %1052 = vmatpush1.bf16.msra.mxu0 0
        %1053 = vmatprep.subr.bf16.mxu0 0
        %1054 = vmatpush1.bf16.msra.mxu0 0
        %1055 = vmatprep.subr.bf16.mxu0 0
        %1056 = vmatpush1.bf16.msra.mxu0 0
        %1057 = vmatprep.subr.bf16.mxu0 0
        %1058 = vmatpush1.bf16.msra.mxu0 0
        %1059 = vmatprep.subr.bf16.mxu0 0
        %1060 = vmatpush1.bf16.msra.mxu0 0
        %1061 = vmatprep.subr.bf16.mxu0 0
        %1062 = vmatpush1.bf16.msra.mxu0 0
        %1063 = vmatprep.subr.bf16.mxu0 0
        %1064 = vmatpush1.bf16.msra.mxu0 0
        %1065 = vmatprep.subr.bf16.mxu0 0
        %1066 = vmatpush1.bf16.msra.mxu0 0
        %1067 = vmatprep.subr.bf16.mxu0 0
        %1068 = vmatpush1.bf16.msra.mxu0 0
        %1069 = vmatprep.subr.bf16.mxu0 0
        %1070 = vmatpush1.bf16.msra.mxu0 0
        %1071 = vmatprep.subr.bf16.mxu0 0
        %1072 = vmatpush1.bf16.msra.mxu0 0
        %1073 = vmatprep.subr.bf16.mxu0 0
        %1074 = vmatpush1.bf16.msra.mxu0 0
        %1075 = vmatprep.subr.bf16.mxu0 0
        %1076 = vmatpush1.bf16.msra.mxu0 0
        %1077 = vmatprep.subr.bf16.mxu0 0
        %1078 = vmatpush1.bf16.msra.mxu0 0
        %1079 = vmatprep.subr.bf16.mxu0 0
        %1080 = vmatpush1.bf16.msra.mxu0 0
        %1081 = vmatprep.mubr.bf16.mxu0 0
        %1082 = vmatmul.mubr.bf16.gmra.mrb[0].mxu0 %v992
        %v1083 = vpop.f32.mrb[0].mxu0
        %v1084 = vadd.f32 0.0, %v1083
        %v1085 = vpop.f32.mrb[0].mxu0
        %v1086 = vadd.f32 0.0, %v1085
        %v1087 = vpop.f32.mrb[0].mxu0
        %v1088 = vadd.f32 0.0, %v1087
        %v1089 = vpop.f32.mrb[0].mxu0
        %v1090 = vadd.f32 0.0, %v1089
        %1091 = vdwg.mxu0
        %v1092 = vadd.f32 %v950, %v1041
        %v1093 = vadd.f32 %v951, %v1043
        %v1094 = vadd.f32 %v952, %v1084
        %v1095 = vadd.f32 %v953, %v1086
        %v1096 = vadd.f32 %v954, %v1045
        %v1097 = vadd.f32 %v955, %v1047
        %v1098 = vadd.f32 %v956, %v1088
        %v1099 = vadd.f32 %v957, %v1090
        %s1100 = scalar_lea.vmem %s1, 56
        %v1101 = vld [vmem:[%s1100] sm:$0xf]
        %v1102 = vld [vmem:[%s1100 + $0x4] sm:$0xf]
        %v1105 = vunpack.c.l.b16 %v1101
        %v1106 = vunpack.c.l.b16 %v1102
        %v1107 = vpack.c.b16 %v1106, %v1105
        %v1110 = vunpack.c.l.s4 1983009808
        %v1111 = vunpack.c.0.s8 %v1110
        %v1112 = vlaneseq
        %v1113 = vshrl.u32 %v1112, 7
        %v1114 = vsub.s32 %v1111, %v1113
        %v1115 = vrot.slane %v964, %v1114
        %1116 = vrot.lane.b32.xlu0 %v981, 127
        %v1117 = vpop.permute.xlu0 %1116
        %1118 = vrot.lane.b32.xlu0 %v989, 127
        %v1119 = vpop.permute.xlu0 %1118
        %1120 = vrot.lane.b32.xlu0 %v988, 127
        %v1121 = vpop.permute.xlu0 %1120
        %1122 = vrot.lane.b32.xlu0 %v990, 127
        %v1123 = vpop.permute.xlu0 %1122
        %1124 = vrot.lane.b32.xlu0 %v1115, 127
        %v1125 = vpop.permute.xlu0 %1124
        %v1126 = vsel %vm200, %v1117, %v1119
        %v1127 = vsel %vm200, %v1119, %v1121
        %v1128 = vsel %vm200, %v1121, %v1123
        %v1129 = vsel %vm200, %v1123, %v1125
        %v1131 = vsel %vm205, %v1107, 0
        %v1134 = vsel %vm209, %v1126, 0
        %v1137 = vsel %vm209, %v1127, 0
        %v1140 = vsel %vm209, %v1128, 0
        %v1143 = vsel %vm209, %v1129, 0
        %1145 = vmatprep.subr.bf16.mxu0 %v1137
        %1146 = vmatpush1.bf16.msra.mxu0 %v1134
        %1147 = vmatprep.subr.bf16.mxu0 0
        %1148 = vmatpush1.bf16.msra.mxu0 0
        %1149 = vmatprep.subr.bf16.mxu0 0
        %1150 = vmatpush1.bf16.msra.mxu0 0
        %1151 = vmatprep.subr.bf16.mxu0 0
        %1152 = vmatpush1.bf16.msra.mxu0 0
        %1153 = vmatprep.subr.bf16.mxu0 0
        %1154 = vmatpush1.bf16.msra.mxu0 0
        %1155 = vmatprep.subr.bf16.mxu0 0
        %1156 = vmatpush1.bf16.msra.mxu0 0
        %1157 = vmatprep.subr.bf16.mxu0 0
        %1158 = vmatpush1.bf16.msra.mxu0 0
        %1159 = vmatprep.subr.bf16.mxu0 0
        %1160 = vmatpush1.bf16.msra.mxu0 0
        %1161 = vmatprep.subr.bf16.mxu0 0
        %1162 = vmatpush1.bf16.msra.mxu0 0
        %1163 = vmatprep.subr.bf16.mxu0 0
        %1164 = vmatpush1.bf16.msra.mxu0 0
        %1165 = vmatprep.subr.bf16.mxu0 0
        %1166 = vmatpush1.bf16.msra.mxu0 0
        %1167 = vmatprep.subr.bf16.mxu0 0
        %1168 = vmatpush1.bf16.msra.mxu0 0
        %1169 = vmatprep.subr.bf16.mxu0 0
        %1170 = vmatpush1.bf16.msra.mxu0 0
        %1171 = vmatprep.subr.bf16.mxu0 0
        %1172 = vmatpush1.bf16.msra.mxu0 0
        %1173 = vmatprep.subr.bf16.mxu0 0
        %1174 = vmatpush1.bf16.msra.mxu0 0
        %1175 = vmatprep.subr.bf16.mxu0 0
        %1176 = vmatpush1.bf16.msra.mxu0 0
        %1177 = vmatprep.mubr.bf16.mxu0 0
        %1178 = vmatmul.mubr.bf16.gmra.mrb[0].mxu0 %v1131
        %v1179 = vpop.f32.mrb[0].mxu0
        %v1180 = vadd.f32 0.0, %v1179
        %v1181 = vpop.f32.mrb[0].mxu0
        %v1182 = vadd.f32 0.0, %v1181
        %v1183 = vpop.f32.mrb[0].mxu0
        %v1184 = vadd.f32 0.0, %v1183
        %v1185 = vpop.f32.mrb[0].mxu0
        %v1186 = vadd.f32 0.0, %v1185
        %1187 = vdwg.mxu0
        %1188 = vmatprep.subr.bf16.mxu0 %v1143
        %1189 = vmatpush1.bf16.msra.mxu0 %v1140
        %1190 = vmatprep.subr.bf16.mxu0 0
        %1191 = vmatpush1.bf16.msra.mxu0 0
        %1192 = vmatprep.subr.bf16.mxu0 0
        %1193 = vmatpush1.bf16.msra.mxu0 0
        %1194 = vmatprep.subr.bf16.mxu0 0
        %1195 = vmatpush1.bf16.msra.mxu0 0
        %1196 = vmatprep.subr.bf16.mxu0 0
        %1197 = vmatpush1.bf16.msra.mxu0 0
        %1198 = vmatprep.subr.bf16.mxu0 0
        %1199 = vmatpush1.bf16.msra.mxu0 0
        %1200 = vmatprep.subr.bf16.mxu0 0
        %1201 = vmatpush1.bf16.msra.mxu0 0
        %1202 = vmatprep.subr.bf16.mxu0 0
        %1203 = vmatpush1.bf16.msra.mxu0 0
        %1204 = vmatprep.subr.bf16.mxu0 0
        %1205 = vmatpush1.bf16.msra.mxu0 0
        %1206 = vmatprep.subr.bf16.mxu0 0
        %1207 = vmatpush1.bf16.msra.mxu0 0
        %1208 = vmatprep.subr.bf16.mxu0 0
        %1209 = vmatpush1.bf16.msra.mxu0 0
        %1210 = vmatprep.subr.bf16.mxu0 0
        %1211 = vmatpush1.bf16.msra.mxu0 0
        %1212 = vmatprep.subr.bf16.mxu0 0
        %1213 = vmatpush1.bf16.msra.mxu0 0
        %1214 = vmatprep.subr.bf16.mxu0 0
        %1215 = vmatpush1.bf16.msra.mxu0 0
        %1216 = vmatprep.subr.bf16.mxu0 0
        %1217 = vmatpush1.bf16.msra.mxu0 0
        %1218 = vmatprep.subr.bf16.mxu0 0
        %1219 = vmatpush1.bf16.msra.mxu0 0
        %1220 = vmatprep.mubr.bf16.mxu0 0
        %1221 = vmatmul.mubr.bf16.gmra.mrb[0].mxu0 %v1131
        %v1222 = vpop.f32.mrb[0].mxu0
        %v1223 = vadd.f32 0.0, %v1222
        %v1224 = vpop.f32.mrb[0].mxu0
        %v1225 = vadd.f32 0.0, %v1224
        %v1226 = vpop.f32.mrb[0].mxu0
        %v1227 = vadd.f32 0.0, %v1226
        %v1228 = vpop.f32.mrb[0].mxu0
        %v1229 = vadd.f32 0.0, %v1228
        %1230 = vdwg.mxu0
        %v1231 = vadd.f32 %v1092, %v1180
        %v1232 = vadd.f32 %v1093, %v1182
        %v1233 = vadd.f32 %v1094, %v1223
        %v1234 = vadd.f32 %v1095, %v1225
        %v1235 = vadd.f32 %v1096, %v1184
        %v1236 = vadd.f32 %v1097, %v1186
        %v1237 = vadd.f32 %v1098, %v1227
        %v1238 = vadd.f32 %v1099, %v1229
        %s1239 = scalar_lea.vmem %s1, 64
        %v1240 = vld [vmem:[%s1239] sm:$0xf]
        %v1241 = vld [vmem:[%s1239 + $0x4] sm:$0xf]
        %v1244 = vunpack.c.l.b16 %v1240
        %v1245 = vunpack.c.l.b16 %v1241
        %v1246 = vpack.c.b16 %v1245, %v1244
        %1247 = vrot.lane.b32.xlu0 %v981, 126
        %v1248 = vpop.permute.xlu0 %1247
        %1249 = vrot.lane.b32.xlu0 %v989, 126
        %v1250 = vpop.permute.xlu0 %1249
        %1251 = vrot.lane.b32.xlu0 %v988, 126
        %v1252 = vpop.permute.xlu0 %1251
        %1253 = vrot.lane.b32.xlu0 %v990, 126
        %v1254 = vpop.permute.xlu0 %1253
        %1255 = vrot.lane.b32.xlu0 %v1115, 126
        %v1256 = vpop.permute.xlu0 %1255
        %v1257 = vsel %vm432, %v1248, %v1250
        %v1258 = vsel %vm432, %v1250, %v1252
        %v1259 = vsel %vm432, %v1252, %v1254
        %v1260 = vsel %vm432, %v1254, %v1256
        %v1262 = vsel %vm205, %v1246, 0
        %v1265 = vsel %vm209, %v1257, 0
        %v1268 = vsel %vm209, %v1258, 0
        %v1271 = vsel %vm209, %v1259, 0
        %v1274 = vsel %vm209, %v1260, 0
        %1276 = vmatprep.subr.bf16.mxu0 %v1268
        %1277 = vmatpush1.bf16.msra.mxu0 %v1265
        %1278 = vmatprep.subr.bf16.mxu0 0
        %1279 = vmatpush1.bf16.msra.mxu0 0
        %1280 = vmatprep.subr.bf16.mxu0 0
        %1281 = vmatpush1.bf16.msra.mxu0 0
        %1282 = vmatprep.subr.bf16.mxu0 0
        %1283 = vmatpush1.bf16.msra.mxu0 0
        %1284 = vmatprep.subr.bf16.mxu0 0
        %1285 = vmatpush1.bf16.msra.mxu0 0
        %1286 = vmatprep.subr.bf16.mxu0 0
        %1287 = vmatpush1.bf16.msra.mxu0 0
        %1288 = vmatprep.subr.bf16.mxu0 0
        %1289 = vmatpush1.bf16.msra.mxu0 0
        %1290 = vmatprep.subr.bf16.mxu0 0
        %1291 = vmatpush1.bf16.msra.mxu0 0
        %1292 = vmatprep.subr.bf16.mxu0 0
        %1293 = vmatpush1.bf16.msra.mxu0 0
        %1294 = vmatprep.subr.bf16.mxu0 0
        %1295 = vmatpush1.bf16.msra.mxu0 0
        %1296 = vmatprep.subr.bf16.mxu0 0
        %1297 = vmatpush1.bf16.msra.mxu0 0
        %1298 = vmatprep.subr.bf16.mxu0 0
        %1299 = vmatpush1.bf16.msra.mxu0 0
        %1300 = vmatprep.subr.bf16.mxu0 0
        %1301 = vmatpush1.bf16.msra.mxu0 0
        %1302 = vmatprep.subr.bf16.mxu0 0
        %1303 = vmatpush1.bf16.msra.mxu0 0
        %1304 = vmatprep.subr.bf16.mxu0 0
        %1305 = vmatpush1.bf16.msra.mxu0 0
        %1306 = vmatprep.subr.bf16.mxu0 0
        %1307 = vmatpush1.bf16.msra.mxu0 0
        %1308 = vmatprep.mubr.bf16.mxu0 0
        %1309 = vmatmul.mubr.bf16.gmra.mrb[0].mxu0 %v1262
        %v1310 = vpop.f32.mrb[0].mxu0
        %v1311 = vadd.f32 0.0, %v1310
        %v1312 = vpop.f32.mrb[0].mxu0
        %v1313 = vadd.f32 0.0, %v1312
        %v1314 = vpop.f32.mrb[0].mxu0
        %v1315 = vadd.f32 0.0, %v1314
        %v1316 = vpop.f32.mrb[0].mxu0
        %v1317 = vadd.f32 0.0, %v1316
        %1318 = vdwg.mxu0
        %1319 = vmatprep.subr.bf16.mxu0 %v1274
        %1320 = vmatpush1.bf16.msra.mxu0 %v1271
        %1321 = vmatprep.subr.bf16.mxu0 0
        %1322 = vmatpush1.bf16.msra.mxu0 0
        %1323 = vmatprep.subr.bf16.mxu0 0
        %1324 = vmatpush1.bf16.msra.mxu0 0
        %1325 = vmatprep.subr.bf16.mxu0 0
        %1326 = vmatpush1.bf16.msra.mxu0 0
        %1327 = vmatprep.subr.bf16.mxu0 0
        %1328 = vmatpush1.bf16.msra.mxu0 0
        %1329 = vmatprep.subr.bf16.mxu0 0
        %1330 = vmatpush1.bf16.msra.mxu0 0
        %1331 = vmatprep.subr.bf16.mxu0 0
        %1332 = vmatpush1.bf16.msra.mxu0 0
        %1333 = vmatprep.subr.bf16.mxu0 0
        %1334 = vmatpush1.bf16.msra.mxu0 0
        %1335 = vmatprep.subr.bf16.mxu0 0
        %1336 = vmatpush1.bf16.msra.mxu0 0
        %1337 = vmatprep.subr.bf16.mxu0 0
        %1338 = vmatpush1.bf16.msra.mxu0 0
        %1339 = vmatprep.subr.bf16.mxu0 0
        %1340 = vmatpush1.bf16.msra.mxu0 0
        %1341 = vmatprep.subr.bf16.mxu0 0
        %1342 = vmatpush1.bf16.msra.mxu0 0
        %1343 = vmatprep.subr.bf16.mxu0 0
        %1344 = vmatpush1.bf16.msra.mxu0 0
        %1345 = vmatprep.subr.bf16.mxu0 0
        %1346 = vmatpush1.bf16.msra.mxu0 0
        %1347 = vmatprep.subr.bf16.mxu0 0
        %1348 = vmatpush1.bf16.msra.mxu0 0
        %1349 = vmatprep.subr.bf16.mxu0 0
        %1350 = vmatpush1.bf16.msra.mxu0 0
        %1351 = vmatprep.mubr.bf16.mxu0 0
        %1352 = vmatmul.mubr.bf16.gmra.mrb[0].mxu0 %v1262
        %v1353 = vpop.f32.mrb[0].mxu0
        %v1354 = vadd.f32 0.0, %v1353
        %v1355 = vpop.f32.mrb[0].mxu0
        %v1356 = vadd.f32 0.0, %v1355
        %v1357 = vpop.f32.mrb[0].mxu0
        %v1358 = vadd.f32 0.0, %v1357
        %v1359 = vpop.f32.mrb[0].mxu0
        %v1360 = vadd.f32 0.0, %v1359
        %1361 = vdwg.mxu0
        %v1362 = vadd.f32 %v1231, %v1311
        %v1363 = vadd.f32 %v1232, %v1313
        %v1364 = vadd.f32 %v1233, %v1354
        %v1365 = vadd.f32 %v1234, %v1356
        %v1366 = vadd.f32 %v1235, %v1315
        %v1367 = vadd.f32 %v1236, %v1317
        %v1368 = vadd.f32 %v1237, %v1358
        %v1369 = vadd.f32 %v1238, %v1360
        %v1370 = vld [vmem:[%s2] sm:$0xff]
        %v1371 = vld [vmem:[%s2 + $0x8] sm:$0xff]
        %1373 = vset.pattern.permute.xlu0 0
        %1374 = vperm.xlu0 %1373, %v1370
        %v1375 = vpop.permute.xlu0 %1374
        %1378 = vset.pattern.permute.xlu0 0
        %1379 = vperm.xlu0 %1378, %v1371
        %v1380 = vpop.permute.xlu0 %1379
        %v1382 = vadd.f32 %v1362, %v1375
        %v1383 = vadd.f32 %v1363, %v1375
        %v1384 = vadd.f32 %v1364, %v1375
        %v1385 = vadd.f32 %v1365, %v1375
        %v1386 = vadd.f32 %v1366, %v1380
        %v1387 = vadd.f32 %v1367, %v1380
        %v1388 = vadd.f32 %v1368, %v1380
        %v1389 = vadd.f32 %v1369, %v1380
        %1390 = vst [vmem:[%s144] sm:$0xff] %v1382
        %1391 = vst [vmem:[%s144 + $0x8] sm:$0xff] %v1383
        %1392 = vst [vmem:[%s144 + $0x10] sm:$0xff] %v1384
        %1393 = vst [vmem:[%s144 + $0x18] sm:$0xff] %v1385
        %1394 = vst [vmem:[%s144 + $0x20] sm:$0xff] %v1386
        %1395 = vst [vmem:[%s144 + $0x28] sm:$0xff] %v1387
        %1396 = vst [vmem:[%s144 + $0x30] sm:$0xff] %v1388
        %1397 = vst [vmem:[%s144 + $0x38] sm:$0xff] %v1389
        %s1398 = sand.u32 %s85, 1
        %s1399 = sand.u32 %s85, 1
        %s1400 = smul.addr %s1399, 64
        %s1401 = scalar_lea.vmem [#allocation2], %s1400
        // Predicated region
        $region33: #{conv2d_pallas.1} parent=31 // pred_check
          %p1402 = pneg %p95
        $region34: #{conv2d_pallas.1} parent=31 // pred_check_branch
          %1404 = sbr.rel (%p1402) target = $region36
        $region35: #{conv2d_pallas.1} parent=31 // pred_region
          %s1405 = smul.u32 4, %s14
          %s1406 = smul.addr %s1405, 8
          %s1407 = scalar_lea.vmem %s3, %s1406
          // Predicated region
          $region37: #{conv2d_pallas.1} parent=35 // pred_check
            _
          $region38: #{conv2d_pallas.1} parent=35 // pred_check_branch
            %1409 = sbr.rel (0) target = $region40
          $region39: #{conv2d_pallas.1} parent=35 // pred_region
            // Predicated region
            $region41: #{conv2d_pallas.1} parent=39 // pred_check
              _
            $region42: #{conv2d_pallas.1} parent=39 // pred_check_branch
              %1411 = sbr.rel (0) target = $region44
            $region43: #{conv2d_pallas.1} parent=39 // pred_region
              loop: start=0, step=1, limit=1
              $region45: #{conv2d_pallas.1} parent=43 // loop_pre_header
                _
              $region46: #{conv2d_pallas.1} parent=43 // loop_header
                %s1413 = sphi 0, %s1417
                %p1414 = scmp.ge.s32.totalorder %s1413, 1
                %s1418 = sphi %s1401, %s1401
                %s1419 = sphi %s1407, %s1407
              $region47: #{conv2d_pallas.1} parent=43 // loop_header_branch
                %1416 = sbr.rel (%p1414) target = $region51
              $region48: #{conv2d_pallas.1} parent=43 // loop_body
                %v1420 = vld [vmem:[%s1418] sm:$0xff]
                %1421 = vst [vmem:[%s1419] sm:$0xff] %v1420
                %v1422 = vld [vmem:[%s1418 + $0x8] sm:$0xff]
                %1423 = vst [vmem:[%s1419 + $0x8] sm:$0xff] %v1422
                %v1424 = vld [vmem:[%s1418 + $0x10] sm:$0xff]
                %1425 = vst [vmem:[%s1419 + $0x10] sm:$0xff] %v1424
                %v1426 = vld [vmem:[%s1418 + $0x18] sm:$0xff]
                %1427 = vst [vmem:[%s1419 + $0x18] sm:$0xff] %v1426
                %v1428 = vld [vmem:[%s1418 + $0x20] sm:$0xff]
                %1429 = vst [vmem:[%s1419 + $0x80] sm:$0xff] %v1428
                %v1430 = vld [vmem:[%s1418 + $0x28] sm:$0xff]
                %1431 = vst [vmem:[%s1419 + $0x88] sm:$0xff] %v1430
                %v1432 = vld [vmem:[%s1418 + $0x30] sm:$0xff]
                %1433 = vst [vmem:[%s1419 + $0x90] sm:$0xff] %v1432
                %v1434 = vld [vmem:[%s1418 + $0x38] sm:$0xff]
                %1435 = vst [vmem:[%s1419 + $0x98] sm:$0xff] %v1434
              $region49: #{conv2d_pallas.1} parent=43 // loop_footer
                %s1417 = sadd.s32 1, %s1413
              $region50: #{conv2d_pallas.1} parent=43 // loop_footer_branch
                %1412 = sbr.rel target = $region46
              $region51: #{conv2d_pallas.1} parent=43 // loop_exit
                _
            $region44: #{conv2d_pallas.1} parent=39 // pred_fallthru
              _
            // Predicated region
            $region52: #{conv2d_pallas.1} parent=39 // pred_check
              _
            $region53: #{conv2d_pallas.1} parent=39 // pred_check_branch
              %1437 = sbr.rel target = $region55
            $region54: #{conv2d_pallas.1} parent=39 // pred_region
              _
            $region55: #{conv2d_pallas.1} parent=39 // pred_fallthru
              _
          $region40: #{conv2d_pallas.1} parent=35 // pred_fallthru
            _
          %1438 = vnop
        $region36: #{conv2d_pallas.1} parent=31 // pred_fallthru
          _
      $region32: #{conv2d_pallas.1} parent=5 // pred_fallthru
        _
      %p1439 = scmp.le.s32.totalorder 2, %s9
      // Predicated region
      $region56: #{conv2d_pallas.1} parent=5 // pred_check
        %p1440 = pneg %p1439
      $region57: #{conv2d_pallas.1} parent=5 // pred_check_branch
        %1442 = sbr.rel (%p1440) target = $region59
      $region58: #{conv2d_pallas.1} parent=5 // pred_region
        %s1443 = ssub.s32 %s9, 2
        // Predicated region
        $region60: #{conv2d_pallas.1} parent=58 // pred_check
          %p1444 = pneg %p101
        $region61: #{conv2d_pallas.1} parent=58 // pred_check_branch
          %1446 = sbr.rel (%p1444) target = $region63
        $region62: #{conv2d_pallas.1} parent=58 // pred_region
          %s1447 = sand.u32 %s86, 1
          %s1448 = sand.u32 %s86, 1
          %s1449 = smul.addr %s1448, 64
          %s1450 = scalar_lea.vmem [#allocation2], %s1449
        $region63: #{conv2d_pallas.1} parent=58 // pred_fallthru
          _
      $region59: #{conv2d_pallas.1} parent=5 // pred_fallthru
        _
    $region6: #{conv2d_pallas.1} parent=1 // loop_footer
      %s13 = sadd.s32 1, %s9
    $region7: #{conv2d_pallas.1} parent=1 // loop_footer_branch
      %8 = sbr.rel target = $region3
    $region8: #{conv2d_pallas.1} parent=1 // loop_exit
      _

</llo_original>
